<compile_context>
chip_gen: v7x
topology: tpu7x:2x2x1
jax: 0.10.0
libtpu: 0.0.40
codegen_flags: <defaults>
</compile_context>

<pallas_src>
import jax
import jax.numpy as jnp
from jax.experimental import pallas as pl
from jax.experimental.pallas import tpu as pltpu

# ---- deterministic ARES-EA lattice geometry (meters) -------------------------
L_D1 = 0.175   # AREASOLA1 -> AREAMQZM1
L_Q  = 0.122   # quadrupole length (AREAMQZM1/2/3)
L_D2 = 0.428   # AREAMQZM1 -> AREAMQZM2
L_D3 = 0.204   # AREAMQZM2 -> AREAMCVM1
L_C  = 0.020   # corrector length (AREAMCVM1 / AREAMCHM1)
L_D4 = 0.204   # AREAMCVM1 -> AREAMQZM3
L_D5 = 0.179   # AREAMQZM3 -> AREAMCHM1
L_D6 = 0.450   # AREAMCHM1 -> AREABSCR1 (screen)

LANE = 128
SUBLANE = 8
MIN_BLOCK = LANE * SUBLANE        # 1024 batch elems = one full (8,128) f32 vreg per feature
MAX_BLOCK = 64 * MIN_BLOCK        # 65536 batch elems per grid step (~6.8 MiB double-buffered)
CHUNK = SUBLANE                   # sublanes per inner-loop iteration (one vreg per feature)
N_FEAT_IN = 9                     # [mu_x, mu_y, sig_x, sig_y, k1_Q1, k1_Q2, ang_CV, k1_Q3, ang_CH]
N_FEAT_OUT = 4


# -------- constant-folding affine (2x2 + kick) composition helpers -----------
def _is_const(v):
    return isinstance(v, (int, float))


def _cmul(a, b):
    if _is_const(a) and _is_const(b):
        return a * b
    if _is_const(a):
        if a == 0.0:
            return 0.0
        if a == 1.0:
            return b
    if _is_const(b):
        if b == 0.0:
            return 0.0
        if b == 1.0:
            return a
    return a * b


def _cadd(a, b):
    if _is_const(a) and a == 0.0:
        return b
    if _is_const(b) and b == 0.0:
        return a
    return a + b


def _compose(elem, acc):
    # new = elem_matrix @ acc_matrix ; new_kick = elem_matrix @ acc_kick + elem_kick
    b11, b12, b21, b22, s1, s2 = elem
    a11, a12, a21, a22, t1, t2 = acc
    return (
        _cadd(_cmul(b11, a11), _cmul(b12, a21)),
        _cadd(_cmul(b11, a12), _cmul(b12, a22)),
        _cadd(_cmul(b21, a11), _cmul(b22, a21)),
        _cadd(_cmul(b21, a12), _cmul(b22, a22)),
        _cadd(_cadd(_cmul(b11, t1), _cmul(b12, t2)), s1),
        _cadd(_cadd(_cmul(b21, t1), _cmul(b22, t2)), s2),
    )


def _track(elems):
    acc = (1.0, 0.0, 0.0, 1.0, 0.0, 0.0)   # identity affine map (pure constants)
    for e in elems:
        acc = _compose(e, acc)
    return acc


def _drift(length):
    return (1.0, float(length), 0.0, 1.0, 0.0, 0.0)


def _corrector(kick):
    # cheetah corrector = drift of its length + additive angle on the momentum coord.
    return (1.0, float(L_C), 0.0, 1.0, 0.0, kick)


def _x_y_elements(q1x, q1y, q2x, q2y, q3x, q3y, ang_cv, ang_ch):
    x_elems = [
        _drift(L_D1), q1x, _drift(L_D2), q2x, _drift(L_D3),
        _corrector(0.0), _drift(L_D4), q3x, _drift(L_D5),
        _corrector(ang_ch), _drift(L_D6),
    ]
    y_elems = [
        _drift(L_D1), q1y, _drift(L_D2), q2y, _drift(L_D3),
        _corrector(ang_cv), _drift(L_D4), q3y, _drift(L_D5),
        _corrector(0.0), _drift(L_D6),
    ]
    return x_elems, y_elems


# -------------------------------- kernel --------------------------------------
def _fast_recip(x):
    # approx EUP reciprocal + one Newton step (~full f32 accuracy, no VALU divide chain)
    r = pl.reciprocal(x, approx=True)
    return r * (2.0 - x * r)


def _quad_both(k1, length):
    # Thick-quad 2x2 maps for BOTH planes (x: g=+k1, y: g=-k1), sharing the transcendentals.
    # cosh/sinh come from a single exp; exp(-aw) is derived via a fast reciprocal.
    w2 = k1 * (length * length)                  # x-plane w^2 ; y-plane is -w2
    aw = jnp.sqrt(jnp.abs(w2))
    small = aw < 1e-6
    safe = jnp.maximum(aw, 1e-6)
    inv_safe = _fast_recip(safe)
    sin_aw = jnp.sin(aw)
    cos_aw = jnp.cos(aw)
    e_pos = jnp.exp(aw)
    e_neg = _fast_recip(e_pos)                   # exp(-aw) = 1/exp(aw)
    cosh_aw = 0.5 * (e_pos + e_neg)
    sinh_aw = 0.5 * (e_pos - e_neg)
    sinc_trig = sin_aw * inv_safe
    sinc_hyp = sinh_aw * inv_safe
    focus = w2 >= 0.0                            # x-plane focusing; y-plane flips
    # small-|w2| Taylor of L-normalized sinc, matching cheetah's smooth g->0 limit
    sinc_x = jnp.where(small, 1.0 - w2 * (1.0 / 6.0),
                       jnp.where(focus, sinc_trig, sinc_hyp))
    sinc_y = jnp.where(small, 1.0 + w2 * (1.0 / 6.0),
                       jnp.where(focus, sinc_hyp, sinc_trig))
    c_x = jnp.where(focus, cos_aw, cosh_aw)
    c_y = jnp.where(focus, cosh_aw, cos_aw)
    s_x = length * sinc_x
    s_y = length * sinc_y
    m21_x = -k1 * s_x                            # -g*s with g = +k1
    m21_y = k1 * s_y                             # -g*s with g = -k1
    return (c_x, s_x, m21_x, c_x, 0.0, 0.0), (c_y, s_y, m21_y, c_y, 0.0, 0.0)


def beam_dynamics_kernel(inc_ref, xu_ref, o_ref):
    # inc_ref: (11,) SMEM — [energy, mu_x, mu_px, mu_y, mu_py, sigma_x, sigma_px,
    #                        sigma_y, sigma_py, sigma_tau, sigma_p]
    # xu_ref:  (9, sub, 128) VMEM — rows [mu_x, mu_y, sigma_x, sigma_y,
    #                                     k1_Q1, k1_Q2, angle_CV, k1_Q3, angle_CH]
    # o_ref:   (4, sub, 128) VMEM — rows [mu_x, mu_y, sigma_x, sigma_y] after tracking

    # scalar reads + scalar products hoisted out of the chunk loop
    mu_px0 = inc_ref[2]
    mu_py0 = inc_ref[4]
    sig_px0 = inc_ref[6]
    sig_py0 = inc_ref[8]
    var_px0 = sig_px0 * sig_px0
    var_py0 = sig_py0 * sig_py0

    # hoisted scalar -> vector broadcasts (not CSE'd if emitted inside the loop)
    mu_px_v = jnp.full((CHUNK, LANE), mu_px0, dtype=jnp.float32)
    mu_py_v = jnp.full((CHUNK, LANE), mu_py0, dtype=jnp.float32)
    var_px_v = jnp.full((CHUNK, LANE), var_px0, dtype=jnp.float32)
    var_py_v = jnp.full((CHUNK, LANE), var_py0, dtype=jnp.float32)

    sub = xu_ref.shape[1]
    n_chunks = sub // CHUNK          # static

    @pl.loop(0, n_chunks)
    def _(c):
        row = pl.multiple_of(c * CHUNK, CHUNK)
        sl = pl.ds(row, CHUNK)

        mu_x = xu_ref[0, sl, :]
        mu_y = xu_ref[1, sl, :]
        sig_x = xu_ref[2, sl, :]
        sig_y = xu_ref[3, sl, :]
        k1_q1 = xu_ref[4, sl, :]
        k1_q2 = xu_ref[5, sl, :]
        ang_cv = xu_ref[6, sl, :]
        k1_q3 = xu_ref[7, sl, :]
        ang_ch = xu_ref[8, sl, :]

        q1x, q1y = _quad_both(k1_q1, L_Q)
        q2x, q2y = _quad_both(k1_q2, L_Q)
        q3x, q3y = _quad_both(k1_q3, L_Q)

        x_elems, y_elems = _x_y_elements(q1x, q1y, q2x, q2y, q3x, q3y, ang_cv, ang_ch)
        ax11, ax12, _, _, tx, _ = _track(x_elems)
        ay11, ay12, _, _, ty, _ = _track(y_elems)

        # mu' = R mu (homogeneous kick column folded into tx/ty)
        mu_x_out = ax11 * mu_x + ax12 * mu_px_v + tx
        mu_y_out = ay11 * mu_y + ay12 * mu_py_v + ty
        # Sigma' = R Sigma R^T with diagonal incoming covariance
        sig_x_out = jnp.sqrt(ax11 * ax11 * (sig_x * sig_x) + (ax12 * ax12) * var_px_v)
        sig_y_out = jnp.sqrt(ay11 * ay11 * (sig_y * sig_y) + (ay12 * ay12) * var_py_v)

        o_ref[0, sl, :] = mu_x_out
        o_ref[1, sl, :] = mu_y_out
        o_ref[2, sl, :] = sig_x_out
        o_ref[3, sl, :] = sig_y_out


# -------------------------------- wrapper --------------------------------------
def _round_up(a, b):
    return ((a + b - 1) // b) * b


def beam_dynamics(x, u, incoming_params):
    """JAX/Pallas equivalent of BeamDynamics.forward.

    x: (B, 4) or (4,), u: (B, 5) or (5,), incoming_params: (11,). Returns (B, 4) float32.
    """
    if x.ndim == 1:
        x = x[None, :]
    if u.ndim == 1:
        u = u[None, :]
    x = x.astype(jnp.float32)
    u = u.astype(jnp.float32)
    incoming_params = incoming_params.astype(jnp.float32)
    batch = x.shape[0]

    # Lane-aligned block sizing:
    #   * blocks up to MAX_BLOCK amortize the ~0.35us per-grid-step overhead,
    #   * >= 2 grid steps whenever the batch allows so v7x's two TensorCores both get work,
    #   * block is a multiple of 8*128 so every feature slab is full (8,128) vreg tiles.
    n_min = _round_up(batch, MIN_BLOCK) // MIN_BLOCK            # batch in MIN_BLOCK units
    nblk = max(-(-(n_min * MIN_BLOCK) // MAX_BLOCK), 2 if n_min >= 2 else 1)
    block = (-(-n_min // nblk)) * MIN_BLOCK                     # <= MAX_BLOCK by construction
    b_pad = nblk * block
    sub = block // LANE

    # single merged repack: (B,4)+(B,5) -> (nblk, 9, sub, 128), batch lane-dense, one transpose
    xu = jnp.concatenate([x, u], axis=1)
    xu = jnp.pad(xu, ((0, b_pad - batch), (0, 0)))
    xu = xu.reshape(nblk, sub, LANE, N_FEAT_IN).transpose(0, 3, 1, 2)

    out = pl.pallas_call(
        beam_dynamics_kernel,
        out_shape=jax.ShapeDtypeStruct((nblk, N_FEAT_OUT, sub, LANE), jnp.float32),
        grid=(nblk,),
        in_specs=[
            pl.BlockSpec(memory_space=pltpu.MemorySpace.SMEM),                       # incoming
            pl.BlockSpec((None, N_FEAT_IN, sub, LANE), lambda i: (i, 0, 0, 0)),      # x|u merged
        ],
        out_specs=pl.BlockSpec((None, N_FEAT_OUT, sub, LANE), lambda i: (i, 0, 0, 0)),
        compiler_params=pltpu.CompilerParams(
            dimension_semantics=("parallel",)),
    )(incoming_params, xu)

    # (nblk, 4, sub, 128) -> (batch, 4): single transpose
    return out.transpose(0, 2, 3, 1).reshape(b_pad, N_FEAT_OUT)[:batch]


# ---------------------- plain-JAX reference (self-check only) -------------------
def _beam_dynamics_reference(x, u, incoming_params):
    mu_x, mu_y, sig_x, sig_y = (x[:, i] for i in range(4))
    k1_q1, k1_q2, ang_cv, k1_q3, ang_ch = (u[:, i] for i in range(5))
    mu_px0, mu_py0 = incoming_params[2], incoming_params[4]
    sig_px0, sig_py0 = incoming_params[6], incoming_params[8]

    def quad_both(k1, length):
        w2 = k1 * (length * length)
        aw = jnp.sqrt(jnp.abs(w2))
        small = aw < 1e-6
        safe = jnp.where(small, 1.0, aw)
        sinc_trig = jnp.sin(aw) / safe
        sinc_hyp = jnp.sinh(aw) / safe
        focus = w2 >= 0.0
        sinc_x = jnp.where(small, 1.0 - w2 / 6.0, jnp.where(focus, sinc_trig, sinc_hyp))
        sinc_y = jnp.where(small, 1.0 + w2 / 6.0, jnp.where(focus, sinc_hyp, sinc_trig))
        c_x = jnp.where(focus, jnp.cos(aw), jnp.cosh(aw))
        c_y = jnp.where(focus, jnp.cosh(aw), jnp.cos(aw))
        s_x = length * sinc_x
        s_y = length * sinc_y
        return (c_x, s_x, -k1 * s_x, c_x, 0.0, 0.0), (c_y, s_y, k1 * s_y, c_y, 0.0, 0.0)

    q1x, q1y = quad_both(k1_q1, L_Q)
    q2x, q2y = quad_both(k1_q2, L_Q)
    q3x, q3y = quad_both(k1_q3, L_Q)
    x_elems, y_elems = _x_y_elements(q1x, q1y, q2x, q2y, q3x, q3y, ang_cv, ang_ch)
    ax11, ax12, _, _, tx, _ = _track(x_elems)
    ay11, ay12, _, _, ty, _ = _track(y_elems)
    mu_x_out = ax11 * mu_x + ax12 * mu_px0 + tx
    mu_y_out = ay11 * mu_y + ay12 * mu_py0 + ty
    sig_x_out = jnp.sqrt((ax11 * sig_x) ** 2 + (ax12 * sig_px0) ** 2)
    sig_y_out = jnp.sqrt((ay11 * sig_y) ** 2 + (ay12 * sig_py0) ** 2)
    return jnp.stack([mu_x_out, mu_y_out, sig_x_out, sig_y_out], axis=-1)


if __name__ == "__main__":
    key = jax.random.PRNGKey(0)
    k_mu, k_sig, k_u = jax.random.split(key, 3)

    B = 8
    mu = jax.random.normal(k_mu, (B, 2), dtype=jnp.float32) * 1e-3             # mu_x, mu_y
    sig = jnp.abs(jax.random.normal(k_sig, (B, 2), dtype=jnp.float32)) * 1e-4 + 1e-4
    x = jnp.concatenate([mu, sig], axis=-1)                                    # (B, 4)

    u = jax.random.normal(k_u, (B, 5), dtype=jnp.float32) * jnp.array(
        [10.0, 10.0, 1e-3, 10.0, 1e-3], dtype=jnp.float32)                     # (B, 5)

    # [energy, mu_x, mu_px, mu_y, mu_py, sigma_x, sigma_px, sigma_y, sigma_py, sigma_tau, sigma_p]
    incoming = jnp.array(
        [1.07e8, 1.0e-4, 1.0e-5, -2.0e-4, -1.0e-5,
         1.75e-4, 2.0e-5, 1.75e-4, 2.0e-5, 1.0e-6, 1.0e-3],
        dtype=jnp.float32)

    out = beam_dynamics(x, u, incoming)
    jax.block_until_ready(out)
    assert out.shape == (B, 4) and out.dtype == jnp.float32
    assert bool(jnp.all(jnp.isfinite(out)))

    ref = _beam_dynamics_reference(x, u, incoming)
    assert bool(jnp.allclose(out, ref, rtol=1e-3, atol=1e-8)), "mismatch vs plain-JAX reference"

    print("KERNEL_OK")
</pallas_src>

<mosaic_0001>
module attributes {stable_mosaic.version = 11 : i64} {
  func.func @beam_dynamics_kernel(%arg0: i32, %arg1: memref<11xf32, #tpu.memory_space<smem>>, %arg2: memref<1x9x8x128xf32, #tpu.memory_space<vmem>>, %arg3: memref<1x4x8x128xf32, #tpu.memory_space<vmem>>) attributes {dimension_semantics = [#tpu.dimension_semantics<parallel>], iteration_bounds = array<i64: 1>, scalar_prefetch = 0 : i64, scratch_operands = 0 : i64, tpu.core_type = #tpu.core_type<tc>, window_params = [{transform_indices = @transform_0, window_bounds = array<i64: 11>}, {transform_indices = @transform_1, window_bounds = array<i64: 1, 9, 8, 128>}, {transform_indices = @transform_2, window_bounds = array<i64: 1, 4, 8, 128>}]} {
    %c2 = arith.constant 2 : index
    %0 = memref.load %arg1[%c2] : memref<11xf32, #tpu.memory_space<smem>>
    %c4 = arith.constant 4 : index
    %1 = memref.load %arg1[%c4] : memref<11xf32, #tpu.memory_space<smem>>
    %c6 = arith.constant 6 : index
    %2 = memref.load %arg1[%c6] : memref<11xf32, #tpu.memory_space<smem>>
    %c8 = arith.constant 8 : index
    %3 = memref.load %arg1[%c8] : memref<11xf32, #tpu.memory_space<smem>>
    %4 = arith.mulf %2, %2 : f32
    %5 = arith.mulf %3, %3 : f32
    %6 = vector.broadcast %0 : f32 to vector<8x128xf32>
    %7 = vector.broadcast %1 : f32 to vector<8x128xf32>
    %8 = vector.broadcast %4 : f32 to vector<8x128xf32>
    %9 = vector.broadcast %5 : f32 to vector<8x128xf32>
    %c0_i32 = arith.constant 0 : i32
    %c1_i32 = arith.constant 1 : i32
    %10 = arith.muli %c0_i32, %c1_i32 : i32
    %c0_i32_0 = arith.constant 0 : i32
    %11 = arith.addi %c0_i32_0, %10 : i32
    %c8_i32 = arith.constant 8 : i32
    %12 = arith.muli %11, %c8_i32 : i32
    %13 = tpu.assume_multiple %12, 8 : i32
    %c0 = arith.constant 0 : index
    %c0_1 = arith.constant 0 : index
    %14 = arith.index_cast %13 : i32 to index
    %c0_2 = arith.constant 0 : index
    %15 = vector.load %arg2[%c0, %c0_1, %14, %c0_2] : memref<1x9x8x128xf32, #tpu.memory_space<vmem>>, vector<1x1x8x128xf32>
    %16 = vector.shape_cast %15 : vector<1x1x8x128xf32> to vector<8x128xf32>
    %c0_3 = arith.constant 0 : index
    %c1 = arith.constant 1 : index
    %17 = arith.index_cast %13 : i32 to index
    %c0_4 = arith.constant 0 : index
    %18 = vector.load %arg2[%c0_3, %c1, %17, %c0_4] : memref<1x9x8x128xf32, #tpu.memory_space<vmem>>, vector<1x1x8x128xf32>
    %19 = vector.shape_cast %18 : vector<1x1x8x128xf32> to vector<8x128xf32>
    %c0_5 = arith.constant 0 : index
    %c2_6 = arith.constant 2 : index
    %20 = arith.index_cast %13 : i32 to index
    %c0_7 = arith.constant 0 : index
    %21 = vector.load %arg2[%c0_5, %c2_6, %20, %c0_7] : memref<1x9x8x128xf32, #tpu.memory_space<vmem>>, vector<1x1x8x128xf32>
    %22 = vector.shape_cast %21 : vector<1x1x8x128xf32> to vector<8x128xf32>
    %c0_8 = arith.constant 0 : index
    %c3 = arith.constant 3 : index
    %23 = arith.index_cast %13 : i32 to index
    %c0_9 = arith.constant 0 : index
    %24 = vector.load %arg2[%c0_8, %c3, %23, %c0_9] : memref<1x9x8x128xf32, #tpu.memory_space<vmem>>, vector<1x1x8x128xf32>
    %25 = vector.shape_cast %24 : vector<1x1x8x128xf32> to vector<8x128xf32>
    %c0_10 = arith.constant 0 : index
    %c4_11 = arith.constant 4 : index
    %26 = arith.index_cast %13 : i32 to index
    %c0_12 = arith.constant 0 : index
    %27 = vector.load %arg2[%c0_10, %c4_11, %26, %c0_12] : memref<1x9x8x128xf32, #tpu.memory_space<vmem>>, vector<1x1x8x128xf32>
    %28 = vector.shape_cast %27 : vector<1x1x8x128xf32> to vector<8x128xf32>
    %c0_13 = arith.constant 0 : index
    %c5 = arith.constant 5 : index
    %29 = arith.index_cast %13 : i32 to index
    %c0_14 = arith.constant 0 : index
    %30 = vector.load %arg2[%c0_13, %c5, %29, %c0_14] : memref<1x9x8x128xf32, #tpu.memory_space<vmem>>, vector<1x1x8x128xf32>
    %31 = vector.shape_cast %30 : vector<1x1x8x128xf32> to vector<8x128xf32>
    %c0_15 = arith.constant 0 : index
    %c6_16 = arith.constant 6 : index
    %32 = arith.index_cast %13 : i32 to index
    %c0_17 = arith.constant 0 : index
    %33 = vector.load %arg2[%c0_15, %c6_16, %32, %c0_17] : memref<1x9x8x128xf32, #tpu.memory_space<vmem>>, vector<1x1x8x128xf32>
    %34 = vector.shape_cast %33 : vector<1x1x8x128xf32> to vector<8x128xf32>
    %c0_18 = arith.constant 0 : index
    %c7 = arith.constant 7 : index
    %35 = arith.index_cast %13 : i32 to index
    %c0_19 = arith.constant 0 : index
    %36 = vector.load %arg2[%c0_18, %c7, %35, %c0_19] : memref<1x9x8x128xf32, #tpu.memory_space<vmem>>, vector<1x1x8x128xf32>
    %37 = vector.shape_cast %36 : vector<1x1x8x128xf32> to vector<8x128xf32>
    %c0_20 = arith.constant 0 : index
    %c8_21 = arith.constant 8 : index
    %38 = arith.index_cast %13 : i32 to index
    %c0_22 = arith.constant 0 : index
    %39 = vector.load %arg2[%c0_20, %c8_21, %38, %c0_22] : memref<1x9x8x128xf32, #tpu.memory_space<vmem>>, vector<1x1x8x128xf32>
    %40 = vector.shape_cast %39 : vector<1x1x8x128xf32> to vector<8x128xf32>
    %cst = arith.constant 1.488400e-02 : f32
    %41 = vector.broadcast %cst : f32 to vector<8x128xf32>
    %42 = arith.mulf %28, %41 : vector<8x128xf32>
    %43 = math.absf %42 : vector<8x128xf32>
    %44 = math.sqrt %43 : vector<8x128xf32>
    %cst_23 = arith.constant 9.99999997E-7 : f32
    %45 = vector.broadcast %cst_23 : f32 to vector<8x128xf32>
    %46 = arith.cmpf olt, %44, %45 : vector<8x128xf32>
    %cst_24 = arith.constant 9.99999997E-7 : f32
    %47 = vector.broadcast %cst_24 : f32 to vector<8x128xf32>
    %48 = arith.maximumf %44, %47 : vector<8x128xf32>
    %49 = tpu.reciprocal %48 {approx = true} : vector<8x128xf32> -> vector<8x128xf32>
    %50 = arith.mulf %48, %49 : vector<8x128xf32>
    %cst_25 = arith.constant 2.000000e+00 : f32
    %51 = vector.broadcast %cst_25 : f32 to vector<8x128xf32>
    %52 = arith.subf %51, %50 : vector<8x128xf32>
    %53 = arith.mulf %49, %52 : vector<8x128xf32>
    %54 = math.sin %44 : vector<8x128xf32>
    %55 = math.cos %44 : vector<8x128xf32>
    %56 = math.exp %44 : vector<8x128xf32>
    %57 = tpu.reciprocal %56 {approx = true} : vector<8x128xf32> -> vector<8x128xf32>
    %58 = arith.mulf %56, %57 : vector<8x128xf32>
    %cst_26 = arith.constant 2.000000e+00 : f32
    %59 = vector.broadcast %cst_26 : f32 to vector<8x128xf32>
    %60 = arith.subf %59, %58 : vector<8x128xf32>
    %61 = arith.mulf %57, %60 : vector<8x128xf32>
    %62 = arith.addf %56, %61 : vector<8x128xf32>
    %cst_27 = arith.constant 5.000000e-01 : f32
    %63 = vector.broadcast %cst_27 : f32 to vector<8x128xf32>
    %64 = arith.mulf %63, %62 : vector<8x128xf32>
    %65 = arith.subf %56, %61 : vector<8x128xf32>
    %cst_28 = arith.constant 5.000000e-01 : f32
    %66 = vector.broadcast %cst_28 : f32 to vector<8x128xf32>
    %67 = arith.mulf %66, %65 : vector<8x128xf32>
    %68 = arith.mulf %54, %53 : vector<8x128xf32>
    %69 = arith.mulf %67, %53 : vector<8x128xf32>
    %cst_29 = arith.constant 0.000000e+00 : f32
    %70 = vector.broadcast %cst_29 : f32 to vector<8x128xf32>
    %71 = arith.cmpf oge, %42, %70 : vector<8x128xf32>
    %cst_30 = arith.constant 0.166666672 : f32
    %72 = vector.broadcast %cst_30 : f32 to vector<8x128xf32>
    %73 = arith.mulf %42, %72 : vector<8x128xf32>
    %cst_31 = arith.constant 1.000000e+00 : f32
    %74 = vector.broadcast %cst_31 : f32 to vector<8x128xf32>
    %75 = arith.subf %74, %73 : vector<8x128xf32>
    %76 = arith.select %71, %68, %69 : vector<8x128xi1>, vector<8x128xf32>
    %77 = arith.select %46, %75, %76 : vector<8x128xi1>, vector<8x128xf32>
    %cst_32 = arith.constant 0.166666672 : f32
    %78 = vector.broadcast %cst_32 : f32 to vector<8x128xf32>
    %79 = arith.mulf %42, %78 : vector<8x128xf32>
    %cst_33 = arith.constant 1.000000e+00 : f32
    %80 = vector.broadcast %cst_33 : f32 to vector<8x128xf32>
    %81 = arith.addf %80, %79 : vector<8x128xf32>
    %82 = arith.select %71, %69, %68 : vector<8x128xi1>, vector<8x128xf32>
    %83 = arith.select %46, %81, %82 : vector<8x128xi1>, vector<8x128xf32>
    %84 = arith.select %71, %55, %64 : vector<8x128xi1>, vector<8x128xf32>
    %85 = arith.select %71, %64, %55 : vector<8x128xi1>, vector<8x128xf32>
    %cst_34 = arith.constant 1.220000e-01 : f32
    %86 = vector.broadcast %cst_34 : f32 to vector<8x128xf32>
    %87 = arith.mulf %86, %77 : vector<8x128xf32>
    %cst_35 = arith.constant 1.220000e-01 : f32
    %88 = vector.broadcast %cst_35 : f32 to vector<8x128xf32>
    %89 = arith.mulf %88, %83 : vector<8x128xf32>
    %cst_36 = arith.constant 0.000000e+00 : f32
    %90 = vector.broadcast %cst_36 : f32 to vector<8x128xf32>
    %91 = arith.subf %90, %28 : vector<8x128xf32>
    %92 = arith.mulf %91, %87 : vector<8x128xf32>
    %93 = arith.mulf %28, %89 : vector<8x128xf32>
    %cst_37 = arith.constant 1.488400e-02 : f32
    %94 = vector.broadcast %cst_37 : f32 to vector<8x128xf32>
    %95 = arith.mulf %31, %94 : vector<8x128xf32>
    %96 = math.absf %95 : vector<8x128xf32>
    %97 = math.sqrt %96 : vector<8x128xf32>
    %cst_38 = arith.constant 9.99999997E-7 : f32
    %98 = vector.broadcast %cst_38 : f32 to vector<8x128xf32>
    %99 = arith.cmpf olt, %97, %98 : vector<8x128xf32>
    %cst_39 = arith.constant 9.99999997E-7 : f32
    %100 = vector.broadcast %cst_39 : f32 to vector<8x128xf32>
    %101 = arith.maximumf %97, %100 : vector<8x128xf32>
    %102 = tpu.reciprocal %101 {approx = true} : vector<8x128xf32> -> vector<8x128xf32>
    %103 = arith.mulf %101, %102 : vector<8x128xf32>
    %cst_40 = arith.constant 2.000000e+00 : f32
    %104 = vector.broadcast %cst_40 : f32 to vector<8x128xf32>
    %105 = arith.subf %104, %103 : vector<8x128xf32>
    %106 = arith.mulf %102, %105 : vector<8x128xf32>
    %107 = math.sin %97 : vector<8x128xf32>
    %108 = math.cos %97 : vector<8x128xf32>
    %109 = math.exp %97 : vector<8x128xf32>
    %110 = tpu.reciprocal %109 {approx = true} : vector<8x128xf32> -> vector<8x128xf32>
    %111 = arith.mulf %109, %110 : vector<8x128xf32>
    %cst_41 = arith.constant 2.000000e+00 : f32
    %112 = vector.broadcast %cst_41 : f32 to vector<8x128xf32>
    %113 = arith.subf %112, %111 : vector<8x128xf32>
    %114 = arith.mulf %110, %113 : vector<8x128xf32>
    %115 = arith.addf %109, %114 : vector<8x128xf32>
    %cst_42 = arith.constant 5.000000e-01 : f32
    %116 = vector.broadcast %cst_42 : f32 to vector<8x128xf32>
    %117 = arith.mulf %116, %115 : vector<8x128xf32>
    %118 = arith.subf %109, %114 : vector<8x128xf32>
    %cst_43 = arith.constant 5.000000e-01 : f32
    %119 = vector.broadcast %cst_43 : f32 to vector<8x128xf32>
    %120 = arith.mulf %119, %118 : vector<8x128xf32>
    %121 = arith.mulf %107, %106 : vector<8x128xf32>
    %122 = arith.mulf %120, %106 : vector<8x128xf32>
    %cst_44 = arith.constant 0.000000e+00 : f32
    %123 = vector.broadcast %cst_44 : f32 to vector<8x128xf32>
    %124 = arith.cmpf oge, %95, %123 : vector<8x128xf32>
    %cst_45 = arith.constant 0.166666672 : f32
    %125 = vector.broadcast %cst_45 : f32 to vector<8x128xf32>
    %126 = arith.mulf %95, %125 : vector<8x128xf32>
    %cst_46 = arith.constant 1.000000e+00 : f32
    %127 = vector.broadcast %cst_46 : f32 to vector<8x128xf32>
    %128 = arith.subf %127, %126 : vector<8x128xf32>
    %129 = arith.select %124, %121, %122 : vector<8x128xi1>, vector<8x128xf32>
    %130 = arith.select %99, %128, %129 : vector<8x128xi1>, vector<8x128xf32>
    %cst_47 = arith.constant 0.166666672 : f32
    %131 = vector.broadcast %cst_47 : f32 to vector<8x128xf32>
    %132 = arith.mulf %95, %131 : vector<8x128xf32>
    %cst_48 = arith.constant 1.000000e+00 : f32
    %133 = vector.broadcast %cst_48 : f32 to vector<8x128xf32>
    %134 = arith.addf %133, %132 : vector<8x128xf32>
    %135 = arith.select %124, %122, %121 : vector<8x128xi1>, vector<8x128xf32>
    %136 = arith.select %99, %134, %135 : vector<8x128xi1>, vector<8x128xf32>
    %137 = arith.select %124, %108, %117 : vector<8x128xi1>, vector<8x128xf32>
    %138 = arith.select %124, %117, %108 : vector<8x128xi1>, vector<8x128xf32>
    %cst_49 = arith.constant 1.220000e-01 : f32
    %139 = vector.broadcast %cst_49 : f32 to vector<8x128xf32>
    %140 = arith.mulf %139, %130 : vector<8x128xf32>
    %cst_50 = arith.constant 1.220000e-01 : f32
    %141 = vector.broadcast %cst_50 : f32 to vector<8x128xf32>
    %142 = arith.mulf %141, %136 : vector<8x128xf32>
    %cst_51 = arith.constant 0.000000e+00 : f32
    %143 = vector.broadcast %cst_51 : f32 to vector<8x128xf32>
    %144 = arith.subf %143, %31 : vector<8x128xf32>
    %145 = arith.mulf %144, %140 : vector<8x128xf32>
    %146 = arith.mulf %31, %142 : vector<8x128xf32>
    %cst_52 = arith.constant 1.488400e-02 : f32
    %147 = vector.broadcast %cst_52 : f32 to vector<8x128xf32>
    %148 = arith.mulf %37, %147 : vector<8x128xf32>
    %149 = math.absf %148 : vector<8x128xf32>
    %150 = math.sqrt %149 : vector<8x128xf32>
    %cst_53 = arith.constant 9.99999997E-7 : f32
    %151 = vector.broadcast %cst_53 : f32 to vector<8x128xf32>
    %152 = arith.cmpf olt, %150, %151 : vector<8x128xf32>
    %cst_54 = arith.constant 9.99999997E-7 : f32
    %153 = vector.broadcast %cst_54 : f32 to vector<8x128xf32>
    %154 = arith.maximumf %150, %153 : vector<8x128xf32>
    %155 = tpu.reciprocal %154 {approx = true} : vector<8x128xf32> -> vector<8x128xf32>
    %156 = arith.mulf %154, %155 : vector<8x128xf32>
    %cst_55 = arith.constant 2.000000e+00 : f32
    %157 = vector.broadcast %cst_55 : f32 to vector<8x128xf32>
    %158 = arith.subf %157, %156 : vector<8x128xf32>
    %159 = arith.mulf %155, %158 : vector<8x128xf32>
    %160 = math.sin %150 : vector<8x128xf32>
    %161 = math.cos %150 : vector<8x128xf32>
    %162 = math.exp %150 : vector<8x128xf32>
    %163 = tpu.reciprocal %162 {approx = true} : vector<8x128xf32> -> vector<8x128xf32>
    %164 = arith.mulf %162, %163 : vector<8x128xf32>
    %cst_56 = arith.constant 2.000000e+00 : f32
    %165 = vector.broadcast %cst_56 : f32 to vector<8x128xf32>
    %166 = arith.subf %165, %164 : vector<8x128xf32>
    %167 = arith.mulf %163, %166 : vector<8x128xf32>
    %168 = arith.addf %162, %167 : vector<8x128xf32>
    %cst_57 = arith.constant 5.000000e-01 : f32
    %169 = vector.broadcast %cst_57 : f32 to vector<8x128xf32>
    %170 = arith.mulf %169, %168 : vector<8x128xf32>
    %171 = arith.subf %162, %167 : vector<8x128xf32>
    %cst_58 = arith.constant 5.000000e-01 : f32
    %172 = vector.broadcast %cst_58 : f32 to vector<8x128xf32>
    %173 = arith.mulf %172, %171 : vector<8x128xf32>
    %174 = arith.mulf %160, %159 : vector<8x128xf32>
    %175 = arith.mulf %173, %159 : vector<8x128xf32>
    %cst_59 = arith.constant 0.000000e+00 : f32
    %176 = vector.broadcast %cst_59 : f32 to vector<8x128xf32>
    %177 = arith.cmpf oge, %148, %176 : vector<8x128xf32>
    %cst_60 = arith.constant 0.166666672 : f32
    %178 = vector.broadcast %cst_60 : f32 to vector<8x128xf32>
    %179 = arith.mulf %148, %178 : vector<8x128xf32>
    %cst_61 = arith.constant 1.000000e+00 : f32
    %180 = vector.broadcast %cst_61 : f32 to vector<8x128xf32>
    %181 = arith.subf %180, %179 : vector<8x128xf32>
    %182 = arith.select %177, %174, %175 : vector<8x128xi1>, vector<8x128xf32>
    %183 = arith.select %152, %181, %182 : vector<8x128xi1>, vector<8x128xf32>
    %cst_62 = arith.constant 0.166666672 : f32
    %184 = vector.broadcast %cst_62 : f32 to vector<8x128xf32>
    %185 = arith.mulf %148, %184 : vector<8x128xf32>
    %cst_63 = arith.constant 1.000000e+00 : f32
    %186 = vector.broadcast %cst_63 : f32 to vector<8x128xf32>
    %187 = arith.addf %186, %185 : vector<8x128xf32>
    %188 = arith.select %177, %175, %174 : vector<8x128xi1>, vector<8x128xf32>
    %189 = arith.select %152, %187, %188 : vector<8x128xi1>, vector<8x128xf32>
    %190 = arith.select %177, %161, %170 : vector<8x128xi1>, vector<8x128xf32>
    %191 = arith.select %177, %170, %161 : vector<8x128xi1>, vector<8x128xf32>
    %cst_64 = arith.constant 1.220000e-01 : f32
    %192 = vector.broadcast %cst_64 : f32 to vector<8x128xf32>
    %193 = arith.mulf %192, %183 : vector<8x128xf32>
    %cst_65 = arith.constant 1.220000e-01 : f32
    %194 = vector.broadcast %cst_65 : f32 to vector<8x128xf32>
    %195 = arith.mulf %194, %189 : vector<8x128xf32>
    %cst_66 = arith.constant 0.000000e+00 : f32
    %196 = vector.broadcast %cst_66 : f32 to vector<8x128xf32>
    %197 = arith.subf %196, %37 : vector<8x128xf32>
    %198 = arith.mulf %197, %193 : vector<8x128xf32>
    %199 = arith.mulf %37, %195 : vector<8x128xf32>
    %cst_67 = arith.constant 1.750000e-01 : f32
    %200 = vector.broadcast %cst_67 : f32 to vector<8x128xf32>
    %201 = arith.mulf %84, %200 : vector<8x128xf32>
    %202 = arith.addf %201, %87 : vector<8x128xf32>
    %cst_68 = arith.constant 1.750000e-01 : f32
    %203 = vector.broadcast %cst_68 : f32 to vector<8x128xf32>
    %204 = arith.mulf %92, %203 : vector<8x128xf32>
    %205 = arith.addf %204, %84 : vector<8x128xf32>
    %cst_69 = arith.constant 4.280000e-01 : f32
    %206 = vector.broadcast %cst_69 : f32 to vector<8x128xf32>
    %207 = arith.mulf %206, %92 : vector<8x128xf32>
    %208 = arith.addf %84, %207 : vector<8x128xf32>
    %cst_70 = arith.constant 4.280000e-01 : f32
    %209 = vector.broadcast %cst_70 : f32 to vector<8x128xf32>
    %210 = arith.mulf %209, %205 : vector<8x128xf32>
    %211 = arith.addf %202, %210 : vector<8x128xf32>
    %212 = arith.mulf %137, %208 : vector<8x128xf32>
    %213 = arith.mulf %140, %92 : vector<8x128xf32>
    %214 = arith.addf %212, %213 : vector<8x128xf32>
    %215 = arith.mulf %137, %211 : vector<8x128xf32>
    %216 = arith.mulf %140, %205 : vector<8x128xf32>
    %217 = arith.addf %215, %216 : vector<8x128xf32>
    %218 = arith.mulf %145, %208 : vector<8x128xf32>
    %219 = arith.mulf %137, %92 : vector<8x128xf32>
    %220 = arith.addf %218, %219 : vector<8x128xf32>
    %221 = arith.mulf %145, %211 : vector<8x128xf32>
    %222 = arith.mulf %137, %205 : vector<8x128xf32>
    %223 = arith.addf %221, %222 : vector<8x128xf32>
    %cst_71 = arith.constant 2.040000e-01 : f32
    %224 = vector.broadcast %cst_71 : f32 to vector<8x128xf32>
    %225 = arith.mulf %224, %220 : vector<8x128xf32>
    %226 = arith.addf %214, %225 : vector<8x128xf32>
    %cst_72 = arith.constant 2.040000e-01 : f32
    %227 = vector.broadcast %cst_72 : f32 to vector<8x128xf32>
    %228 = arith.mulf %227, %223 : vector<8x128xf32>
    %229 = arith.addf %217, %228 : vector<8x128xf32>
    %cst_73 = arith.constant 2.000000e-02 : f32
    %230 = vector.broadcast %cst_73 : f32 to vector<8x128xf32>
    %231 = arith.mulf %230, %220 : vector<8x128xf32>
    %232 = arith.addf %226, %231 : vector<8x128xf32>
    %cst_74 = arith.constant 2.000000e-02 : f32
    %233 = vector.broadcast %cst_74 : f32 to vector<8x128xf32>
    %234 = arith.mulf %233, %223 : vector<8x128xf32>
    %235 = arith.addf %229, %234 : vector<8x128xf32>
    %cst_75 = arith.constant 2.040000e-01 : f32
    %236 = vector.broadcast %cst_75 : f32 to vector<8x128xf32>
    %237 = arith.mulf %236, %220 : vector<8x128xf32>
    %238 = arith.addf %232, %237 : vector<8x128xf32>
    %cst_76 = arith.constant 2.040000e-01 : f32
    %239 = vector.broadcast %cst_76 : f32 to vector<8x128xf32>
    %240 = arith.mulf %239, %223 : vector<8x128xf32>
    %241 = arith.addf %235, %240 : vector<8x128xf32>
    %242 = arith.mulf %190, %238 : vector<8x128xf32>
    %243 = arith.mulf %193, %220 : vector<8x128xf32>
    %244 = arith.addf %242, %243 : vector<8x128xf32>
    %245 = arith.mulf %190, %241 : vector<8x128xf32>
    %246 = arith.mulf %193, %223 : vector<8x128xf32>
    %247 = arith.addf %245, %246 : vector<8x128xf32>
    %248 = arith.mulf %198, %238 : vector<8x128xf32>
    %249 = arith.mulf %190, %220 : vector<8x128xf32>
    %250 = arith.addf %248, %249 : vector<8x128xf32>
    %251 = arith.mulf %198, %241 : vector<8x128xf32>
    %252 = arith.mulf %190, %223 : vector<8x128xf32>
    %253 = arith.addf %251, %252 : vector<8x128xf32>
    %cst_77 = arith.constant 1.790000e-01 : f32
    %254 = vector.broadcast %cst_77 : f32 to vector<8x128xf32>
    %255 = arith.mulf %254, %250 : vector<8x128xf32>
    %256 = arith.addf %244, %255 : vector<8x128xf32>
    %cst_78 = arith.constant 1.790000e-01 : f32
    %257 = vector.broadcast %cst_78 : f32 to vector<8x128xf32>
    %258 = arith.mulf %257, %253 : vector<8x128xf32>
    %259 = arith.addf %247, %258 : vector<8x128xf32>
    %cst_79 = arith.constant 2.000000e-02 : f32
    %260 = vector.broadcast %cst_79 : f32 to vector<8x128xf32>
    %261 = arith.mulf %260, %250 : vector<8x128xf32>
    %262 = arith.addf %256, %261 : vector<8x128xf32>
    %cst_80 = arith.constant 2.000000e-02 : f32
    %263 = vector.broadcast %cst_80 : f32 to vector<8x128xf32>
    %264 = arith.mulf %263, %253 : vector<8x128xf32>
    %265 = arith.addf %259, %264 : vector<8x128xf32>
    %cst_81 = arith.constant 4.500000e-01 : f32
    %266 = vector.broadcast %cst_81 : f32 to vector<8x128xf32>
    %267 = arith.mulf %266, %250 : vector<8x128xf32>
    %268 = arith.addf %262, %267 : vector<8x128xf32>
    %cst_82 = arith.constant 4.500000e-01 : f32
    %269 = vector.broadcast %cst_82 : f32 to vector<8x128xf32>
    %270 = arith.mulf %269, %253 : vector<8x128xf32>
    %271 = arith.addf %265, %270 : vector<8x128xf32>
    %cst_83 = arith.constant 4.500000e-01 : f32
    %272 = vector.broadcast %cst_83 : f32 to vector<8x128xf32>
    %273 = arith.mulf %272, %40 : vector<8x128xf32>
    %cst_84 = arith.constant 1.750000e-01 : f32
    %274 = vector.broadcast %cst_84 : f32 to vector<8x128xf32>
    %275 = arith.mulf %85, %274 : vector<8x128xf32>
    %276 = arith.addf %275, %89 : vector<8x128xf32>
    %cst_85 = arith.constant 1.750000e-01 : f32
    %277 = vector.broadcast %cst_85 : f32 to vector<8x128xf32>
    %278 = arith.mulf %93, %277 : vector<8x128xf32>
    %279 = arith.addf %278, %85 : vector<8x128xf32>
    %cst_86 = arith.constant 4.280000e-01 : f32
    %280 = vector.broadcast %cst_86 : f32 to vector<8x128xf32>
    %281 = arith.mulf %280, %93 : vector<8x128xf32>
    %282 = arith.addf %85, %281 : vector<8x128xf32>
    %cst_87 = arith.constant 4.280000e-01 : f32
    %283 = vector.broadcast %cst_87 : f32 to vector<8x128xf32>
    %284 = arith.mulf %283, %279 : vector<8x128xf32>
    %285 = arith.addf %276, %284 : vector<8x128xf32>
    %286 = arith.mulf %138, %282 : vector<8x128xf32>
    %287 = arith.mulf %142, %93 : vector<8x128xf32>
    %288 = arith.addf %286, %287 : vector<8x128xf32>
    %289 = arith.mulf %138, %285 : vector<8x128xf32>
    %290 = arith.mulf %142, %279 : vector<8x128xf32>
    %291 = arith.addf %289, %290 : vector<8x128xf32>
    %292 = arith.mulf %146, %282 : vector<8x128xf32>
    %293 = arith.mulf %138, %93 : vector<8x128xf32>
    %294 = arith.addf %292, %293 : vector<8x128xf32>
    %295 = arith.mulf %146, %285 : vector<8x128xf32>
    %296 = arith.mulf %138, %279 : vector<8x128xf32>
    %297 = arith.addf %295, %296 : vector<8x128xf32>
    %cst_88 = arith.constant 2.040000e-01 : f32
    %298 = vector.broadcast %cst_88 : f32 to vector<8x128xf32>
    %299 = arith.mulf %298, %294 : vector<8x128xf32>
    %300 = arith.addf %288, %299 : vector<8x128xf32>
    %cst_89 = arith.constant 2.040000e-01 : f32
    %301 = vector.broadcast %cst_89 : f32 to vector<8x128xf32>
    %302 = arith.mulf %301, %297 : vector<8x128xf32>
    %303 = arith.addf %291, %302 : vector<8x128xf32>
    %cst_90 = arith.constant 2.000000e-02 : f32
    %304 = vector.broadcast %cst_90 : f32 to vector<8x128xf32>
    %305 = arith.mulf %304, %294 : vector<8x128xf32>
    %306 = arith.addf %300, %305 : vector<8x128xf32>
    %cst_91 = arith.constant 2.000000e-02 : f32
    %307 = vector.broadcast %cst_91 : f32 to vector<8x128xf32>
    %308 = arith.mulf %307, %297 : vector<8x128xf32>
    %309 = arith.addf %303, %308 : vector<8x128xf32>
    %cst_92 = arith.constant 2.040000e-01 : f32
    %310 = vector.broadcast %cst_92 : f32 to vector<8x128xf32>
    %311 = arith.mulf %310, %294 : vector<8x128xf32>
    %312 = arith.addf %306, %311 : vector<8x128xf32>
    %cst_93 = arith.constant 2.040000e-01 : f32
    %313 = vector.broadcast %cst_93 : f32 to vector<8x128xf32>
    %314 = arith.mulf %313, %297 : vector<8x128xf32>
    %315 = arith.addf %309, %314 : vector<8x128xf32>
    %cst_94 = arith.constant 2.040000e-01 : f32
    %316 = vector.broadcast %cst_94 : f32 to vector<8x128xf32>
    %317 = arith.mulf %316, %34 : vector<8x128xf32>
    %318 = arith.mulf %191, %312 : vector<8x128xf32>
    %319 = arith.mulf %195, %294 : vector<8x128xf32>
    %320 = arith.addf %318, %319 : vector<8x128xf32>
    %321 = arith.mulf %191, %315 : vector<8x128xf32>
    %322 = arith.mulf %195, %297 : vector<8x128xf32>
    %323 = arith.addf %321, %322 : vector<8x128xf32>
    %324 = arith.mulf %199, %312 : vector<8x128xf32>
    %325 = arith.mulf %191, %294 : vector<8x128xf32>
    %326 = arith.addf %324, %325 : vector<8x128xf32>
    %327 = arith.mulf %199, %315 : vector<8x128xf32>
    %328 = arith.mulf %191, %297 : vector<8x128xf32>
    %329 = arith.addf %327, %328 : vector<8x128xf32>
    %330 = arith.mulf %191, %317 : vector<8x128xf32>
    %331 = arith.mulf %195, %34 : vector<8x128xf32>
    %332 = arith.addf %330, %331 : vector<8x128xf32>
    %333 = arith.mulf %199, %317 : vector<8x128xf32>
    %334 = arith.mulf %191, %34 : vector<8x128xf32>
    %335 = arith.addf %333, %334 : vector<8x128xf32>
    %cst_95 = arith.constant 1.790000e-01 : f32
    %336 = vector.broadcast %cst_95 : f32 to vector<8x128xf32>
    %337 = arith.mulf %336, %326 : vector<8x128xf32>
    %338 = arith.addf %320, %337 : vector<8x128xf32>
    %cst_96 = arith.constant 1.790000e-01 : f32
    %339 = vector.broadcast %cst_96 : f32 to vector<8x128xf32>
    %340 = arith.mulf %339, %329 : vector<8x128xf32>
    %341 = arith.addf %323, %340 : vector<8x128xf32>
    %cst_97 = arith.constant 1.790000e-01 : f32
    %342 = vector.broadcast %cst_97 : f32 to vector<8x128xf32>
    %343 = arith.mulf %342, %335 : vector<8x128xf32>
    %344 = arith.addf %332, %343 : vector<8x128xf32>
    %cst_98 = arith.constant 2.000000e-02 : f32
    %345 = vector.broadcast %cst_98 : f32 to vector<8x128xf32>
    %346 = arith.mulf %345, %326 : vector<8x128xf32>
    %347 = arith.addf %338, %346 : vector<8x128xf32>
    %cst_99 = arith.constant 2.000000e-02 : f32
    %348 = vector.broadcast %cst_99 : f32 to vector<8x128xf32>
    %349 = arith.mulf %348, %329 : vector<8x128xf32>
    %350 = arith.addf %341, %349 : vector<8x128xf32>
    %cst_100 = arith.constant 2.000000e-02 : f32
    %351 = vector.broadcast %cst_100 : f32 to vector<8x128xf32>
    %352 = arith.mulf %351, %335 : vector<8x128xf32>
    %353 = arith.addf %344, %352 : vector<8x128xf32>
    %cst_101 = arith.constant 4.500000e-01 : f32
    %354 = vector.broadcast %cst_101 : f32 to vector<8x128xf32>
    %355 = arith.mulf %354, %326 : vector<8x128xf32>
    %356 = arith.addf %347, %355 : vector<8x128xf32>
    %cst_102 = arith.constant 4.500000e-01 : f32
    %357 = vector.broadcast %cst_102 : f32 to vector<8x128xf32>
    %358 = arith.mulf %357, %329 : vector<8x128xf32>
    %359 = arith.addf %350, %358 : vector<8x128xf32>
    %cst_103 = arith.constant 4.500000e-01 : f32
    %360 = vector.broadcast %cst_103 : f32 to vector<8x128xf32>
    %361 = arith.mulf %360, %335 : vector<8x128xf32>
    %362 = arith.addf %353, %361 : vector<8x128xf32>
    %363 = arith.mulf %268, %16 : vector<8x128xf32>
    %364 = arith.mulf %271, %6 : vector<8x128xf32>
    %365 = arith.addf %363, %364 : vector<8x128xf32>
    %366 = arith.addf %365, %273 : vector<8x128xf32>
    %367 = arith.mulf %356, %19 : vector<8x128xf32>
    %368 = arith.mulf %359, %7 : vector<8x128xf32>
    %369 = arith.addf %367, %368 : vector<8x128xf32>
    %370 = arith.addf %369, %362 : vector<8x128xf32>
    %371 = arith.mulf %268, %268 : vector<8x128xf32>
    %372 = arith.mulf %22, %22 : vector<8x128xf32>
    %373 = arith.mulf %371, %372 : vector<8x128xf32>
    %374 = arith.mulf %271, %271 : vector<8x128xf32>
    %375 = arith.mulf %374, %8 : vector<8x128xf32>
    %376 = arith.addf %373, %375 : vector<8x128xf32>
    %377 = math.sqrt %376 : vector<8x128xf32>
    %378 = arith.mulf %356, %356 : vector<8x128xf32>
    %379 = arith.mulf %25, %25 : vector<8x128xf32>
    %380 = arith.mulf %378, %379 : vector<8x128xf32>
    %381 = arith.mulf %359, %359 : vector<8x128xf32>
    %382 = arith.mulf %381, %9 : vector<8x128xf32>
    %383 = arith.addf %380, %382 : vector<8x128xf32>
    %384 = math.sqrt %383 : vector<8x128xf32>
    %c0_104 = arith.constant 0 : index
    %c0_105 = arith.constant 0 : index
    %385 = arith.index_cast %13 : i32 to index
    %c0_106 = arith.constant 0 : index
    %386 = vector.load %arg3[%c0_104, %c0_105, %385, %c0_106] : memref<1x4x8x128xf32, #tpu.memory_space<vmem>>, vector<1x1x8x128xf32>
    %387 = vector.shape_cast %386 : vector<1x1x8x128xf32> to vector<8x128xf32>
    %388 = vector.shape_cast %366 : vector<8x128xf32> to vector<1x1x8x128xf32>
    tpu.vector_store %arg3[%c0_104, %c0_105, %385, %c0_106], %388 {strides = array<i32>} : memref<1x4x8x128xf32, #tpu.memory_space<vmem>>, vector<1x1x8x128xf32>,
    %c0_107 = arith.constant 0 : index
    %c1_108 = arith.constant 1 : index
    %389 = arith.index_cast %13 : i32 to index
    %c0_109 = arith.constant 0 : index
    %390 = vector.load %arg3[%c0_107, %c1_108, %389, %c0_109] : memref<1x4x8x128xf32, #tpu.memory_space<vmem>>, vector<1x1x8x128xf32>
    %391 = vector.shape_cast %390 : vector<1x1x8x128xf32> to vector<8x128xf32>
    %392 = vector.shape_cast %370 : vector<8x128xf32> to vector<1x1x8x128xf32>
    tpu.vector_store %arg3[%c0_107, %c1_108, %389, %c0_109], %392 {strides = array<i32>} : memref<1x4x8x128xf32, #tpu.memory_space<vmem>>, vector<1x1x8x128xf32>,
    %c0_110 = arith.constant 0 : index
    %c2_111 = arith.constant 2 : index
    %393 = arith.index_cast %13 : i32 to index
    %c0_112 = arith.constant 0 : index
    %394 = vector.load %arg3[%c0_110, %c2_111, %393, %c0_112] : memref<1x4x8x128xf32, #tpu.memory_space<vmem>>, vector<1x1x8x128xf32>
    %395 = vector.shape_cast %394 : vector<1x1x8x128xf32> to vector<8x128xf32>
    %396 = vector.shape_cast %377 : vector<8x128xf32> to vector<1x1x8x128xf32>
    tpu.vector_store %arg3[%c0_110, %c2_111, %393, %c0_112], %396 {strides = array<i32>} : memref<1x4x8x128xf32, #tpu.memory_space<vmem>>, vector<1x1x8x128xf32>,
    %c0_113 = arith.constant 0 : index
    %c3_114 = arith.constant 3 : index
    %397 = arith.index_cast %13 : i32 to index
    %c0_115 = arith.constant 0 : index
    %398 = vector.load %arg3[%c0_113, %c3_114, %397, %c0_115] : memref<1x4x8x128xf32, #tpu.memory_space<vmem>>, vector<1x1x8x128xf32>
    %399 = vector.shape_cast %398 : vector<1x1x8x128xf32> to vector<8x128xf32>
    %400 = vector.shape_cast %384 : vector<8x128xf32> to vector<1x1x8x128xf32>
    tpu.vector_store %arg3[%c0_113, %c3_114, %397, %c0_115], %400 {strides = array<i32>} : memref<1x4x8x128xf32, #tpu.memory_space<vmem>>, vector<1x1x8x128xf32>,
    %c1_i32_116 = arith.constant 1 : i32
    return
  }
  func.func @transform_0(%arg0: i32) -> i32 {
    %c0_i32 = arith.constant 0 : i32
    %c0_i32_0 = arith.constant 0 : i32
    return %c0_i32 : i32
  }
  func.func @transform_1(%arg0: i32) -> (i32, i32, i32, i32) {
    %c0_i32 = arith.constant 0 : i32
    %c0_i32_0 = arith.constant 0 : i32
    %c0_i32_1 = arith.constant 0 : i32
    %c0_i32_2 = arith.constant 0 : i32
    return %arg0, %c0_i32, %c0_i32_0, %c0_i32_1 : i32, i32, i32, i32
  }
  func.func @transform_2(%arg0: i32) -> (i32, i32, i32, i32) {
    %c0_i32 = arith.constant 0 : i32
    %c0_i32_0 = arith.constant 0 : i32
    %c0_i32_1 = arith.constant 0 : i32
    %c0_i32_2 = arith.constant 0 : i32
    return %arg0, %c0_i32, %c0_i32_0, %c0_i32_1 : i32, i32, i32, i32
  }
}

</mosaic_0001>

<llo_original>
// kernel: tpu_custom_call.1
$region0: #{tpu_custom_call.1}
  #allocation0 [shape = 'u32[]', space=smem, size = 0x4, offset = 0x4, fixed_abs, tag = 'smem constant byte address 0x4 - core index']
  #allocation1 [shape = 'u32[144,128]{1,0:T(1,128)}', space=vmem, size = 0x12000, scoped, tag = 'internal scratch']
  %s0 = inlined_call_operand.hbm [shape: f32[11], index: 0, kind: input, shape index: {}]
  %s1 = inlined_call_operand.hbm [shape: f32[1,9,8,128], index: 1, kind: input, shape index: {}]
  %s2 = inlined_call_operand.hbm [shape: f32[1,4,8,128], index: 2, kind: output, shape index: {}]
  %s3 = sld [smem:[#allocation0]]
  $region26: #{tpu_custom_call.1} parent=0
    _
  %s5 = ssub.s32 1, %s3
  %s6 = scalar_select 0, %s5, %s3
  $region1: #{tpu_custom_call.1} parent=0
    #allocation2 [shape = 'u8[512]{0}', space=smem, size = 0x200, scoped, tag = 'input window, operand 0, single buffered']
    #allocation3 [shape = 's32[1]{0}', space=sflag, size = 0x4, scoped, tag = 'scoped memory for tpu_custom_call.1']
    #allocation4 [shape = 's32[1]{0}', space=sflag, size = 0x4, scoped, tag = 'scoped memory for tpu_custom_call.1']
    #allocation5 [shape = 's32[1]{0}', space=sflag, size = 0x4, scoped, tag = 'scoped memory for tpu_custom_call.1']
    #allocation6 [shape = 'u8[36864]{0}', space=vmem, size = 0x9000, scoped, tag = 'input window, operand 1, single buffered']
    #allocation7 [shape = 'u8[16384]{0}', space=vmem, size = 0x4000, scoped, tag = 'output window, operand 0, single buffered']
    %7 = vsyncpa [#allocation5], 0
    %8 = vsyncpa [#allocation3], 0
    %9 = vsyncpa [#allocation4], 0
    // Predicated region
    $region2: #{tpu_custom_call.1} parent=1 // pred_check
      _
    $region3: #{tpu_custom_call.1} parent=1 // pred_check_branch
      %11 = sbr.rel (0) target = $region5
    $region4: #{tpu_custom_call.1} parent=1 // pred_region
      %s13 = ssub.s32 16, 16
      %14 = vsyncadd [#allocation5], %s13
      %17 = dma.hbm_to_smem %s0, 16, [#allocation2], [#allocation5]
    $region5: #{tpu_custom_call.1} parent=1 // pred_fallthru
      _
    // Predicated region
    $region6: #{tpu_custom_call.1} parent=1 // pred_check
      _
    $region7: #{tpu_custom_call.1} parent=1 // pred_check_branch
      %19 = sbr.rel (0) target = $region9
    $region8: #{tpu_custom_call.1} parent=1 // pred_region
      %s21 = ssub.s32 1152, 1152
      %22 = vsyncadd [#allocation3], %s21
      %s23 = sshll.u32 [#allocation6], 4
      %s24 = int_to_ptr.vmem [resolvable:$true] %s23
      %29 = dma.hbm_to_vmem [thread:$0]  %s1, 1152, %s24, [#allocation3], 128, 128, 8
    $region9: #{tpu_custom_call.1} parent=1 // pred_fallthru
      _
    // Predicated region
    $region10: #{tpu_custom_call.1} parent=1 // pred_check
      _
    $region11: #{tpu_custom_call.1} parent=1 // pred_check_branch
      %31 = sbr.rel (0) target = $region13
    $region12: #{tpu_custom_call.1} parent=1 // pred_region
      %32 = dma.done [#allocation5], 16
    $region13: #{tpu_custom_call.1} parent=1 // pred_fallthru
      _
    // Predicated region
    $region14: #{tpu_custom_call.1} parent=1 // pred_check
      _
    $region15: #{tpu_custom_call.1} parent=1 // pred_check_branch
      %34 = sbr.rel (0) target = $region17
    $region16: #{tpu_custom_call.1} parent=1 // pred_region
      %35 = dma.done [#allocation3], 1152
    $region17: #{tpu_custom_call.1} parent=1 // pred_fallthru
      _
    %36 = sfence
    %s37 = sld [smem:[#allocation2 + $0x2]]
    %s38 = sld [smem:[#allocation2 + $0x4]]
    %s39 = sld [smem:[#allocation2 + $0x6]]
    %s40 = sld [smem:[#allocation2 + $0x8]]
    %s41 = smul.f32 %s39, %s39
    %s42 = smul.f32 %s40, %s40
    %v43 = vstv %s37
    %v44 = vstv %s38
    %v45 = vstv %s41
    %v46 = vstv %s42
    %v47 = vld [vmem:[#allocation6] sm:$0xff]
    %s48 = sadd.s32 0, 8
    %s49 = scalar_lea.vmem [#allocation6], %s48
    %v50 = vld [vmem:[%s49] sm:$0xff]
    %s51 = sadd.s32 0, 16
    %s52 = scalar_lea.vmem [#allocation6], %s51
    %v53 = vld [vmem:[%s52] sm:$0xff]
    %s54 = sadd.s32 0, 24
    %s55 = scalar_lea.vmem [#allocation6], %s54
    %v56 = vld [vmem:[%s55] sm:$0xff]
    %s57 = sadd.s32 0, 32
    %s58 = scalar_lea.vmem [#allocation6], %s57
    %v59 = vld [vmem:[%s58] sm:$0xff]
    %s60 = sadd.s32 0, 40
    %s61 = scalar_lea.vmem [#allocation6], %s60
    %v62 = vld [vmem:[%s61] sm:$0xff]
    %s63 = sadd.s32 0, 48
    %s64 = scalar_lea.vmem [#allocation6], %s63
    %v65 = vld [vmem:[%s64] sm:$0xff]
    %s66 = sadd.s32 0, 56
    %s67 = scalar_lea.vmem [#allocation6], %s66
    %v68 = vld [vmem:[%s67] sm:$0xff]
    %s69 = sadd.s32 0, 64
    %s70 = scalar_lea.vmem [#allocation6], %s69
    %v71 = vld [vmem:[%s70] sm:$0xff]
    %v72 = vmul.f32 %v59, 0.014884
    %v73 = vand.u32 2147483647, %v72
    %v74 = vrsqrt.pop %v73
    %v75 = vmul.f32 %v73, %v74
    %vm76 = vcmp.eq.f32.partialorder %v73, inf
    %v77 = vsel %vm76, %v73, %v75
    %vm78 = vcmp.eq.f32.partialorder %v73, 0.0
    %v79 = vand.u32 %v73, 2147483648
    %v80 = vsel %vm78, %v79, %v77
    %vm81 = vcmp.lt.f32.partialorder %v80, 1e-06
    %v82 = vmax.f32 %v80, 1e-06
    %v83 = vrcp.pop %v82
    %v84 = vmul.f32 %v82, %v83
    %v85 = vsub.f32 2.0, %v84
    %v86 = vmul.f32 %v83, %v85
    %v87 = vand.u32 2147483647, %v80
    %vm88 = vcmp.le.f32.partialorder %v87, 0.7853982
    %vm89 = vcmp.lt.s32.totalorder %v80, 0
    %v90 = vand.u32 %v80, 2139095040
    %v91 = vshrl.u32 %v90, 23
    %v92 = vsub.s32 %v91, 127
    %v93 = vand.u32 2147483647, %v80
    %v94 = vand.u32 %v93, 8388607
    %v95 = vor.u32 %v94, 8388608
    %v96 = vsub.s32 0, %v95
    %v97 = vadd.s32 %v92, 1
    %vm98 = vcmp.gt.s32.totalorder %v97, 0
    %v99 = vsel %vm98, %v97, 0
    %v100 = vshrl.u32 %v99, 5
    %v101 = vand.u32 %v99, 31
    %v102 = vsub.s32 32, %v101
    %v103 = vshrl.u32 683565275, %v102
    %v104 = vshll.u32 683565275, %v101
    %v105 = vshrl.u32 2475754826, %v102
    %v106 = vor.u32 %v104, %v105
    %v107 = vshll.u32 2475754826, %v101
    %v108 = vshrl.u32 2131351028, %v102
    %v109 = vor.u32 %v107, %v108
    %v110 = vshll.u32 2131351028, %v101
    %v111 = vshrl.u32 2102212464, %v102
    %v112 = vor.u32 %v110, %v111
    %v113 = vshll.u32 2102212464, %v101
    %v114 = vshrl.u32 920167782, %v102
    %v115 = vor.u32 %v113, %v114
    %v116 = vshll.u32 920167782, %v101
    %v117 = vshrl.u32 1326507024, %v102
    %v118 = vor.u32 %v116, %v117
    %vm119 = vcmp.lt.s32.totalorder %v100, 1
    %vm120 = vcmp.lt.s32.totalorder %v100, 2
    %vm121 = vcmp.lt.s32.totalorder %v100, 3
    %vm122 = vcmp.lt.s32.totalorder %v100, 4
    %v123 = vsel %vm119, %v103, %v106
    %v124 = vsel %vm122, %v112, 2102212464
    %v125 = vsel %vm121, %v109, %v124
    %v126 = vsel %vm120, %v123, %v125
    %v127 = vsel %vm119, %v106, %v109
    %v128 = vsel %vm122, %v115, 920167782
    %v129 = vsel %vm121, %v112, %v128
    %v130 = vsel %vm120, %v127, %v129
    %v131 = vsel %vm119, %v109, %v112
    %v132 = vsel %vm122, %v118, 1326507024
    %v133 = vsel %vm121, %v115, %v132
    %v134 = vsel %vm120, %v131, %v133
    %v135 = vshll.u32 %v95, 8
    %v136 = vmul.u32.u64.compose %v135, %v134
    %v137 = vextract.low.u32 %v136
    %v138 = vextract.high.u32 %v136
    %v139 = vmul.u32.u64.compose %v135, %v130
    %v140 = vextract.low.u32 %v139
    %v141 = vextract.high.u32 %v139
    %v142 = vmul.u32 %v135, %v126
    %v143 = vadd.s32 %v138, %v140
    %vm144 = vc.u32 %v138, %v140
    %v145 = vadd.s32 %v141, 1
    %v146 = vsel %vm144, %v145, %v141
    %v147 = vadd.s32 %v142, %v146
    %v148 = vadd.s32 %v147, 536870912
    %v149 = vshrl.u32 %v148, 30
    %v150 = vshll.u32 %v149, 30
    %v151 = vsub.s32 %v147, %v150
    %vm152 = vcmp.lt.s32.totalorder %v151, 0
    %v153 = vsub.s32 0, %v151
    %v154 = vsel %vm152, %v153, %v151
    %v155 = vclz %v154
    %v156 = vsub.s32 %v155, 2
    %vm157 = vcmp.gt.s32.totalorder 0, %v156
    %v158 = vsel %vm157, 0, %v156
    %v159 = vsub.s32 32, %v158
    %v160 = vshll.u32 %v151, %v158
    %v161 = vshrl.u32 %v143, %v159
    %v162 = vor.u32 %v160, %v161
    %v163 = vsub.s32 4294967266, %v158
    %v164 = vadd.s32 %v163, 127
    %v165 = vshll.u32 %v164, 23
    %v166 = vor.u32 4788187, %v165
    %v167 = vand.u32 2147483647, %v166
    %v169 = vcvt.s32.f32 %v162
    %v170 = vmul.f32 %v169, %v167
    %v171 = vxor.u32 %v170, 2147483648
    %v172 = vsel %vm89, %v171, %v170
    %v173 = vsub.s32 4, %v149
    %v174 = vsel %vm89, %v173, %v149
    %v175 = vsel %vm88, %v80, %v172
    %v176 = vsel %vm88, 0, %v174
    %v177 = vcosq.f32.pop %v175
    %v178 = vsinq.f32.pop %v175
    %vm179 = vweird.f32 %v80
    %v180 = vadd.s32 %v176, 3
    %v181 = vand.u32 %v180, 3
    %vm182 = vcmp.lt.s32.totalorder %v181, 2
    %vm183 = vcmp.eq.s32.totalorder %v181, 0
    %v184 = vxor.u32 %v178, 2147483648
    %v185 = vsel %vm183, %v177, %v184
    %vm186 = vcmp.eq.s32.totalorder %v181, 2
    %v187 = vxor.u32 %v177, 2147483648
    %v188 = vsel %vm186, %v187, %v178
    %v189 = vsel %vm182, %v185, %v188
    %v190 = vsel %vm179, nan, %v189
    %v191 = vand.u32 2147483647, %v80
    %vm192 = vcmp.le.f32.partialorder %v191, 0.7853982
    %vm193 = vcmp.lt.s32.totalorder %v80, 0
    %v194 = vand.u32 %v80, 2139095040
    %v195 = vshrl.u32 %v194, 23
    %v196 = vsub.s32 %v195, 127
    %v197 = vand.u32 2147483647, %v80
    %v198 = vand.u32 %v197, 8388607
    %v199 = vor.u32 %v198, 8388608
    %v200 = vsub.s32 0, %v199
    %v201 = vadd.s32 %v196, 1
    %vm202 = vcmp.gt.s32.totalorder %v201, 0
    %v203 = vsel %vm202, %v201, 0
    %v204 = vshrl.u32 %v203, 5
    %v205 = vand.u32 %v203, 31
    %v206 = vsub.s32 32, %v205
    %v207 = vshrl.u32 683565275, %v206
    %v208 = vshll.u32 683565275, %v205
    %v209 = vshrl.u32 2475754826, %v206
    %v210 = vor.u32 %v208, %v209
    %v211 = vshll.u32 2475754826, %v205
    %v212 = vshrl.u32 2131351028, %v206
    %v213 = vor.u32 %v211, %v212
    %v214 = vshll.u32 2131351028, %v205
    %v215 = vshrl.u32 2102212464, %v206
    %v216 = vor.u32 %v214, %v215
    %v217 = vshll.u32 2102212464, %v205
    %v218 = vshrl.u32 920167782, %v206
    %v219 = vor.u32 %v217, %v218
    %v220 = vshll.u32 920167782, %v205
    %v221 = vshrl.u32 1326507024, %v206
    %v222 = vor.u32 %v220, %v221
    %vm223 = vcmp.lt.s32.totalorder %v204, 1
    %vm224 = vcmp.lt.s32.totalorder %v204, 2
    %vm225 = vcmp.lt.s32.totalorder %v204, 3
    %vm226 = vcmp.lt.s32.totalorder %v204, 4
    %v227 = vsel %vm223, %v207, %v210
    %v228 = vsel %vm226, %v216, 2102212464
    %v229 = vsel %vm225, %v213, %v228
    %v230 = vsel %vm224, %v227, %v229
    %v231 = vsel %vm223, %v210, %v213
    %v232 = vsel %vm226, %v219, 920167782
    %v233 = vsel %vm225, %v216, %v232
    %v234 = vsel %vm224, %v231, %v233
    %v235 = vsel %vm223, %v213, %v216
    %v236 = vsel %vm226, %v222, 1326507024
    %v237 = vsel %vm225, %v219, %v236
    %v238 = vsel %vm224, %v235, %v237
    %v239 = vshll.u32 %v199, 8
    %v240 = vmul.u32.u64.compose %v239, %v238
    %v241 = vextract.low.u32 %v240
    %v242 = vextract.high.u32 %v240
    %v243 = vmul.u32.u64.compose %v239, %v234
    %v244 = vextract.low.u32 %v243
    %v245 = vextract.high.u32 %v243
    %v246 = vmul.u32 %v239, %v230
    %v247 = vadd.s32 %v242, %v244
    %vm248 = vc.u32 %v242, %v244
    %v249 = vadd.s32 %v245, 1
    %v250 = vsel %vm248, %v249, %v245
    %v251 = vadd.s32 %v246, %v250
    %v252 = vadd.s32 %v251, 536870912
    %v253 = vshrl.u32 %v252, 30
    %v254 = vshll.u32 %v253, 30
    %v255 = vsub.s32 %v251, %v254
    %vm256 = vcmp.lt.s32.totalorder %v255, 0
    %v257 = vsub.s32 0, %v255
    %v258 = vsel %vm256, %v257, %v255
    %v259 = vclz %v258
    %v260 = vsub.s32 %v259, 2
    %vm261 = vcmp.gt.s32.totalorder 0, %v260
    %v262 = vsel %vm261, 0, %v260
    %v263 = vsub.s32 32, %v262
    %v264 = vshll.u32 %v255, %v262
    %v265 = vshrl.u32 %v247, %v263
    %v266 = vor.u32 %v264, %v265
    %v267 = vsub.s32 4294967266, %v262
    %v268 = vadd.s32 %v267, 127
    %v269 = vshll.u32 %v268, 23
    %v270 = vor.u32 4788187, %v269
    %v271 = vand.u32 2147483647, %v270
    %v273 = vcvt.s32.f32 %v266
    %v274 = vmul.f32 %v273, %v271
    %v275 = vxor.u32 %v274, 2147483648
    %v276 = vsel %vm193, %v275, %v274
    %v277 = vsub.s32 4, %v253
    %v278 = vsel %vm193, %v277, %v253
    %v279 = vsel %vm192, %v80, %v276
    %v280 = vsel %vm192, 0, %v278
    %v281 = vcosq.f32.pop %v279
    %v282 = vsinq.f32.pop %v279
    %vm283 = vweird.f32 %v80
    %v284 = vand.u32 %v280, 3
    %vm285 = vcmp.lt.s32.totalorder %v284, 2
    %vm286 = vcmp.eq.s32.totalorder %v284, 0
    %v287 = vxor.u32 %v282, 2147483648
    %v288 = vsel %vm286, %v281, %v287
    %vm289 = vcmp.eq.s32.totalorder %v284, 2
    %v290 = vxor.u32 %v281, 2147483648
    %v291 = vsel %vm289, %v290, %v282
    %v292 = vsel %vm285, %v288, %v291
    %v293 = vsel %vm283, nan, %v292
    %v294 = vmul.f32 %v80, 1.442695
    %v295 = vpow.pop %v294
    %v296 = vrcp.pop %v295
    %v297 = vmul.f32 %v295, %v296
    %v298 = vsub.f32 2.0, %v297
    %v299 = vmul.f32 %v296, %v298
    %v300 = vadd.f32 %v295, %v299
    %v301 = vmul.f32 %v300, 0.5
    %v302 = vsub.f32 %v295, %v299
    %v303 = vmul.f32 %v302, 0.5
    %v304 = vmul.f32 %v190, %v86
    %v305 = vmul.f32 %v303, %v86
    %vm306 = vcmp.ge.f32.partialorder %v72, 0.0
    %v307 = vmul.f32 %v72, 0.16666667
    %v308 = vsub.f32 1.0, %v307
    %v309 = vsel %vm306, %v304, %v305
    %v310 = vsel %vm81, %v308, %v309
    %v311 = vadd.f32 %v307, 1.0
    %v312 = vsel %vm306, %v305, %v304
    %v313 = vsel %vm81, %v311, %v312
    %v314 = vsel %vm306, %v293, %v301
    %v315 = vsel %vm306, %v301, %v293
    %v316 = vmul.f32 %v310, 0.122
    %v317 = vmul.f32 %v313, 0.122
    %v318 = vsub.f32 0.0, %v59
    %v319 = vmul.f32 %v318, %v316
    %v320 = vmul.f32 %v59, %v317
    %v321 = vmul.f32 %v62, 0.014884
    %v322 = vand.u32 2147483647, %v321
    %v323 = vrsqrt.pop %v322
    %v324 = vmul.f32 %v322, %v323
    %vm325 = vcmp.eq.f32.partialorder %v322, inf
    %v326 = vsel %vm325, %v322, %v324
    %vm327 = vcmp.eq.f32.partialorder %v322, 0.0
    %v328 = vand.u32 %v322, 2147483648
    %v329 = vsel %vm327, %v328, %v326
    %vm330 = vcmp.lt.f32.partialorder %v329, 1e-06
    %v331 = vmax.f32 %v329, 1e-06
    %v332 = vrcp.pop %v331
    %v333 = vmul.f32 %v331, %v332
    %v334 = vsub.f32 2.0, %v333
    %v335 = vmul.f32 %v332, %v334
    %v336 = vand.u32 2147483647, %v329
    %vm337 = vcmp.le.f32.partialorder %v336, 0.7853982
    %vm338 = vcmp.lt.s32.totalorder %v329, 0
    %v339 = vand.u32 %v329, 2139095040
    %v340 = vshrl.u32 %v339, 23
    %v341 = vsub.s32 %v340, 127
    %v342 = vand.u32 2147483647, %v329
    %v343 = vand.u32 %v342, 8388607
    %v344 = vor.u32 %v343, 8388608
    %v345 = vsub.s32 0, %v344
    %v346 = vadd.s32 %v341, 1
    %vm347 = vcmp.gt.s32.totalorder %v346, 0
    %v348 = vsel %vm347, %v346, 0
    %v349 = vshrl.u32 %v348, 5
    %v350 = vand.u32 %v348, 31
    %v351 = vsub.s32 32, %v350
    %v352 = vshrl.u32 683565275, %v351
    %v353 = vshll.u32 683565275, %v350
    %v354 = vshrl.u32 2475754826, %v351
    %v355 = vor.u32 %v353, %v354
    %v356 = vshll.u32 2475754826, %v350
    %v357 = vshrl.u32 2131351028, %v351
    %v358 = vor.u32 %v356, %v357
    %v359 = vshll.u32 2131351028, %v350
    %v360 = vshrl.u32 2102212464, %v351
    %v361 = vor.u32 %v359, %v360
    %v362 = vshll.u32 2102212464, %v350
    %v363 = vshrl.u32 920167782, %v351
    %v364 = vor.u32 %v362, %v363
    %v365 = vshll.u32 920167782, %v350
    %v366 = vshrl.u32 1326507024, %v351
    %v367 = vor.u32 %v365, %v366
    %vm368 = vcmp.lt.s32.totalorder %v349, 1
    %vm369 = vcmp.lt.s32.totalorder %v349, 2
    %vm370 = vcmp.lt.s32.totalorder %v349, 3
    %vm371 = vcmp.lt.s32.totalorder %v349, 4
    %v372 = vsel %vm368, %v352, %v355
    %v373 = vsel %vm371, %v361, 2102212464
    %v374 = vsel %vm370, %v358, %v373
    %v375 = vsel %vm369, %v372, %v374
    %v376 = vsel %vm368, %v355, %v358
    %v377 = vsel %vm371, %v364, 920167782
    %v378 = vsel %vm370, %v361, %v377
    %v379 = vsel %vm369, %v376, %v378
    %v380 = vsel %vm368, %v358, %v361
    %v381 = vsel %vm371, %v367, 1326507024
    %v382 = vsel %vm370, %v364, %v381
    %v383 = vsel %vm369, %v380, %v382
    %v384 = vshll.u32 %v344, 8
    %v385 = vmul.u32.u64.compose %v384, %v383
    %v386 = vextract.low.u32 %v385
    %v387 = vextract.high.u32 %v385
    %v388 = vmul.u32.u64.compose %v384, %v379
    %v389 = vextract.low.u32 %v388
    %v390 = vextract.high.u32 %v388
    %v391 = vmul.u32 %v384, %v375
    %v392 = vadd.s32 %v387, %v389
    %vm393 = vc.u32 %v387, %v389
    %v394 = vadd.s32 %v390, 1
    %v395 = vsel %vm393, %v394, %v390
    %v396 = vadd.s32 %v391, %v395
    %v397 = vadd.s32 %v396, 536870912
    %v398 = vshrl.u32 %v397, 30
    %v399 = vshll.u32 %v398, 30
    %v400 = vsub.s32 %v396, %v399
    %vm401 = vcmp.lt.s32.totalorder %v400, 0
    %v402 = vsub.s32 0, %v400
    %v403 = vsel %vm401, %v402, %v400
    %v404 = vclz %v403
    %v405 = vsub.s32 %v404, 2
    %vm406 = vcmp.gt.s32.totalorder 0, %v405
    %v407 = vsel %vm406, 0, %v405
    %v408 = vsub.s32 32, %v407
    %v409 = vshll.u32 %v400, %v407
    %v410 = vshrl.u32 %v392, %v408
    %v411 = vor.u32 %v409, %v410
    %v412 = vsub.s32 4294967266, %v407
    %v413 = vadd.s32 %v412, 127
    %v414 = vshll.u32 %v413, 23
    %v415 = vor.u32 4788187, %v414
    %v416 = vand.u32 2147483647, %v415
    %v418 = vcvt.s32.f32 %v411
    %v419 = vmul.f32 %v418, %v416
    %v420 = vxor.u32 %v419, 2147483648
    %v421 = vsel %vm338, %v420, %v419
    %v422 = vsub.s32 4, %v398
    %v423 = vsel %vm338, %v422, %v398
    %v424 = vsel %vm337, %v329, %v421
    %v425 = vsel %vm337, 0, %v423
    %v426 = vcosq.f32.pop %v424
    %v427 = vsinq.f32.pop %v424
    %vm428 = vweird.f32 %v329
    %v429 = vadd.s32 %v425, 3
    %v430 = vand.u32 %v429, 3
    %vm431 = vcmp.lt.s32.totalorder %v430, 2
    %vm432 = vcmp.eq.s32.totalorder %v430, 0
    %v433 = vxor.u32 %v427, 2147483648
    %v434 = vsel %vm432, %v426, %v433
    %vm435 = vcmp.eq.s32.totalorder %v430, 2
    %v436 = vxor.u32 %v426, 2147483648
    %v437 = vsel %vm435, %v436, %v427
    %v438 = vsel %vm431, %v434, %v437
    %v439 = vsel %vm428, nan, %v438
    %v440 = vand.u32 2147483647, %v329
    %vm441 = vcmp.le.f32.partialorder %v440, 0.7853982
    %vm442 = vcmp.lt.s32.totalorder %v329, 0
    %v443 = vand.u32 %v329, 2139095040
    %v444 = vshrl.u32 %v443, 23
    %v445 = vsub.s32 %v444, 127
    %v446 = vand.u32 2147483647, %v329
    %v447 = vand.u32 %v446, 8388607
    %v448 = vor.u32 %v447, 8388608
    %v449 = vsub.s32 0, %v448
    %v450 = vadd.s32 %v445, 1
    %vm451 = vcmp.gt.s32.totalorder %v450, 0
    %v452 = vsel %vm451, %v450, 0
    %v453 = vshrl.u32 %v452, 5
    %v454 = vand.u32 %v452, 31
    %v455 = vsub.s32 32, %v454
    %v456 = vshrl.u32 683565275, %v455
    %v457 = vshll.u32 683565275, %v454
    %v458 = vshrl.u32 2475754826, %v455
    %v459 = vor.u32 %v457, %v458
    %v460 = vshll.u32 2475754826, %v454
    %v461 = vshrl.u32 2131351028, %v455
    %v462 = vor.u32 %v460, %v461
    %v463 = vshll.u32 2131351028, %v454
    %v464 = vshrl.u32 2102212464, %v455
    %v465 = vor.u32 %v463, %v464
    %v466 = vshll.u32 2102212464, %v454
    %v467 = vshrl.u32 920167782, %v455
    %v468 = vor.u32 %v466, %v467
    %v469 = vshll.u32 920167782, %v454
    %v470 = vshrl.u32 1326507024, %v455
    %v471 = vor.u32 %v469, %v470
    %vm472 = vcmp.lt.s32.totalorder %v453, 1
    %vm473 = vcmp.lt.s32.totalorder %v453, 2
    %vm474 = vcmp.lt.s32.totalorder %v453, 3
    %vm475 = vcmp.lt.s32.totalorder %v453, 4
    %v476 = vsel %vm472, %v456, %v459
    %v477 = vsel %vm475, %v465, 2102212464
    %v478 = vsel %vm474, %v462, %v477
    %v479 = vsel %vm473, %v476, %v478
    %v480 = vsel %vm472, %v459, %v462
    %v481 = vsel %vm475, %v468, 920167782
    %v482 = vsel %vm474, %v465, %v481
    %v483 = vsel %vm473, %v480, %v482
    %v484 = vsel %vm472, %v462, %v465
    %v485 = vsel %vm475, %v471, 1326507024
    %v486 = vsel %vm474, %v468, %v485
    %v487 = vsel %vm473, %v484, %v486
    %v488 = vshll.u32 %v448, 8
    %v489 = vmul.u32.u64.compose %v488, %v487
    %v490 = vextract.low.u32 %v489
    %v491 = vextract.high.u32 %v489
    %v492 = vmul.u32.u64.compose %v488, %v483
    %v493 = vextract.low.u32 %v492
    %v494 = vextract.high.u32 %v492
    %v495 = vmul.u32 %v488, %v479
    %v496 = vadd.s32 %v491, %v493
    %vm497 = vc.u32 %v491, %v493
    %v498 = vadd.s32 %v494, 1
    %v499 = vsel %vm497, %v498, %v494
    %v500 = vadd.s32 %v495, %v499
    %v501 = vadd.s32 %v500, 536870912
    %v502 = vshrl.u32 %v501, 30
    %v503 = vshll.u32 %v502, 30
    %v504 = vsub.s32 %v500, %v503
    %vm505 = vcmp.lt.s32.totalorder %v504, 0
    %v506 = vsub.s32 0, %v504
    %v507 = vsel %vm505, %v506, %v504
    %v508 = vclz %v507
    %v509 = vsub.s32 %v508, 2
    %vm510 = vcmp.gt.s32.totalorder 0, %v509
    %v511 = vsel %vm510, 0, %v509
    %v512 = vsub.s32 32, %v511
    %v513 = vshll.u32 %v504, %v511
    %v514 = vshrl.u32 %v496, %v512
    %v515 = vor.u32 %v513, %v514
    %v516 = vsub.s32 4294967266, %v511
    %v517 = vadd.s32 %v516, 127
    %v518 = vshll.u32 %v517, 23
    %v519 = vor.u32 4788187, %v518
    %v520 = vand.u32 2147483647, %v519
    %v522 = vcvt.s32.f32 %v515
    %v523 = vmul.f32 %v522, %v520
    %v524 = vxor.u32 %v523, 2147483648
    %v525 = vsel %vm442, %v524, %v523
    %v526 = vsub.s32 4, %v502
    %v527 = vsel %vm442, %v526, %v502
    %v528 = vsel %vm441, %v329, %v525
    %v529 = vsel %vm441, 0, %v527
    %v530 = vcosq.f32.pop %v528
    %v531 = vsinq.f32.pop %v528
    %vm532 = vweird.f32 %v329
    %v533 = vand.u32 %v529, 3
    %vm534 = vcmp.lt.s32.totalorder %v533, 2
    %vm535 = vcmp.eq.s32.totalorder %v533, 0
    %v536 = vxor.u32 %v531, 2147483648
    %v537 = vsel %vm535, %v530, %v536
    %vm538 = vcmp.eq.s32.totalorder %v533, 2
    %v539 = vxor.u32 %v530, 2147483648
    %v540 = vsel %vm538, %v539, %v531
    %v541 = vsel %vm534, %v537, %v540
    %v542 = vsel %vm532, nan, %v541
    %v543 = vmul.f32 %v329, 1.442695
    %v544 = vpow.pop %v543
    %v545 = vrcp.pop %v544
    %v546 = vmul.f32 %v544, %v545
    %v547 = vsub.f32 2.0, %v546
    %v548 = vmul.f32 %v545, %v547
    %v549 = vadd.f32 %v544, %v548
    %v550 = vmul.f32 %v549, 0.5
    %v551 = vsub.f32 %v544, %v548
    %v552 = vmul.f32 %v551, 0.5
    %v553 = vmul.f32 %v439, %v335
    %v554 = vmul.f32 %v552, %v335
    %vm555 = vcmp.ge.f32.partialorder %v321, 0.0
    %v556 = vmul.f32 %v321, 0.16666667
    %v557 = vsub.f32 1.0, %v556
    %v558 = vsel %vm555, %v553, %v554
    %v559 = vsel %vm330, %v557, %v558
    %v560 = vadd.f32 %v556, 1.0
    %v561 = vsel %vm555, %v554, %v553
    %v562 = vsel %vm330, %v560, %v561
    %v563 = vsel %vm555, %v542, %v550
    %v564 = vsel %vm555, %v550, %v542
    %v565 = vmul.f32 %v559, 0.122
    %v566 = vmul.f32 %v562, 0.122
    %v567 = vsub.f32 0.0, %v62
    %v568 = vmul.f32 %v567, %v565
    %v569 = vmul.f32 %v62, %v566
    %v570 = vmul.f32 %v68, 0.014884
    %v571 = vand.u32 2147483647, %v570
    %v572 = vrsqrt.pop %v571
    %v573 = vmul.f32 %v571, %v572
    %vm574 = vcmp.eq.f32.partialorder %v571, inf
    %v575 = vsel %vm574, %v571, %v573
    %vm576 = vcmp.eq.f32.partialorder %v571, 0.0
    %v577 = vand.u32 %v571, 2147483648
    %v578 = vsel %vm576, %v577, %v575
    %vm579 = vcmp.lt.f32.partialorder %v578, 1e-06
    %v580 = vmax.f32 %v578, 1e-06
    %v581 = vrcp.pop %v580
    %v582 = vmul.f32 %v580, %v581
    %v583 = vsub.f32 2.0, %v582
    %v584 = vmul.f32 %v581, %v583
    %v585 = vand.u32 2147483647, %v578
    %vm586 = vcmp.le.f32.partialorder %v585, 0.7853982
    %vm587 = vcmp.lt.s32.totalorder %v578, 0
    %v588 = vand.u32 %v578, 2139095040
    %v589 = vshrl.u32 %v588, 23
    %v590 = vsub.s32 %v589, 127
    %v591 = vand.u32 2147483647, %v578
    %v592 = vand.u32 %v591, 8388607
    %v593 = vor.u32 %v592, 8388608
    %v594 = vsub.s32 0, %v593
    %v595 = vadd.s32 %v590, 1
    %vm596 = vcmp.gt.s32.totalorder %v595, 0
    %v597 = vsel %vm596, %v595, 0
    %v598 = vshrl.u32 %v597, 5
    %v599 = vand.u32 %v597, 31
    %v600 = vsub.s32 32, %v599
    %v601 = vshrl.u32 683565275, %v600
    %v602 = vshll.u32 683565275, %v599
    %v603 = vshrl.u32 2475754826, %v600
    %v604 = vor.u32 %v602, %v603
    %v605 = vshll.u32 2475754826, %v599
    %v606 = vshrl.u32 2131351028, %v600
    %v607 = vor.u32 %v605, %v606
    %v608 = vshll.u32 2131351028, %v599
    %v609 = vshrl.u32 2102212464, %v600
    %v610 = vor.u32 %v608, %v609
    %v611 = vshll.u32 2102212464, %v599
    %v612 = vshrl.u32 920167782, %v600
    %v613 = vor.u32 %v611, %v612
    %v614 = vshll.u32 920167782, %v599
    %v615 = vshrl.u32 1326507024, %v600
    %v616 = vor.u32 %v614, %v615
    %vm617 = vcmp.lt.s32.totalorder %v598, 1
    %vm618 = vcmp.lt.s32.totalorder %v598, 2
    %vm619 = vcmp.lt.s32.totalorder %v598, 3
    %vm620 = vcmp.lt.s32.totalorder %v598, 4
    %v621 = vsel %vm617, %v601, %v604
    %v622 = vsel %vm620, %v610, 2102212464
    %v623 = vsel %vm619, %v607, %v622
    %v624 = vsel %vm618, %v621, %v623
    %v625 = vsel %vm617, %v604, %v607
    %v626 = vsel %vm620, %v613, 920167782
    %v627 = vsel %vm619, %v610, %v626
    %v628 = vsel %vm618, %v625, %v627
    %v629 = vsel %vm617, %v607, %v610
    %v630 = vsel %vm620, %v616, 1326507024
    %v631 = vsel %vm619, %v613, %v630
    %v632 = vsel %vm618, %v629, %v631
    %v633 = vshll.u32 %v593, 8
    %v634 = vmul.u32.u64.compose %v633, %v632
    %v635 = vextract.low.u32 %v634
    %v636 = vextract.high.u32 %v634
    %v637 = vmul.u32.u64.compose %v633, %v628
    %v638 = vextract.low.u32 %v637
    %v639 = vextract.high.u32 %v637
    %v640 = vmul.u32 %v633, %v624
    %v641 = vadd.s32 %v636, %v638
    %vm642 = vc.u32 %v636, %v638
    %v643 = vadd.s32 %v639, 1
    %v644 = vsel %vm642, %v643, %v639
    %v645 = vadd.s32 %v640, %v644
    %v646 = vadd.s32 %v645, 536870912
    %v647 = vshrl.u32 %v646, 30
    %v648 = vshll.u32 %v647, 30
    %v649 = vsub.s32 %v645, %v648
    %vm650 = vcmp.lt.s32.totalorder %v649, 0
    %v651 = vsub.s32 0, %v649
    %v652 = vsel %vm650, %v651, %v649
    %v653 = vclz %v652
    %v654 = vsub.s32 %v653, 2
    %vm655 = vcmp.gt.s32.totalorder 0, %v654
    %v656 = vsel %vm655, 0, %v654
    %v657 = vsub.s32 32, %v656
    %v658 = vshll.u32 %v649, %v656
    %v659 = vshrl.u32 %v641, %v657
    %v660 = vor.u32 %v658, %v659
    %v661 = vsub.s32 4294967266, %v656
    %v662 = vadd.s32 %v661, 127
    %v663 = vshll.u32 %v662, 23
    %v664 = vor.u32 4788187, %v663
    %v665 = vand.u32 2147483647, %v664
    %v667 = vcvt.s32.f32 %v660
    %v668 = vmul.f32 %v667, %v665
    %v669 = vxor.u32 %v668, 2147483648
    %v670 = vsel %vm587, %v669, %v668
    %v671 = vsub.s32 4, %v647
    %v672 = vsel %vm587, %v671, %v647
    %v673 = vsel %vm586, %v578, %v670
    %v674 = vsel %vm586, 0, %v672
    %v675 = vcosq.f32.pop %v673
    %v676 = vsinq.f32.pop %v673
    %vm677 = vweird.f32 %v578
    %v678 = vadd.s32 %v674, 3
    %v679 = vand.u32 %v678, 3
    %vm680 = vcmp.lt.s32.totalorder %v679, 2
    %vm681 = vcmp.eq.s32.totalorder %v679, 0
    %v682 = vxor.u32 %v676, 2147483648
    %v683 = vsel %vm681, %v675, %v682
    %vm684 = vcmp.eq.s32.totalorder %v679, 2
    %v685 = vxor.u32 %v675, 2147483648
    %v686 = vsel %vm684, %v685, %v676
    %v687 = vsel %vm680, %v683, %v686
    %v688 = vsel %vm677, nan, %v687
    %v689 = vand.u32 2147483647, %v578
    %vm690 = vcmp.le.f32.partialorder %v689, 0.7853982
    %vm691 = vcmp.lt.s32.totalorder %v578, 0
    %v692 = vand.u32 %v578, 2139095040
    %v693 = vshrl.u32 %v692, 23
    %v694 = vsub.s32 %v693, 127
    %v695 = vand.u32 2147483647, %v578
    %v696 = vand.u32 %v695, 8388607
    %v697 = vor.u32 %v696, 8388608
    %v698 = vsub.s32 0, %v697
    %v699 = vadd.s32 %v694, 1
    %vm700 = vcmp.gt.s32.totalorder %v699, 0
    %v701 = vsel %vm700, %v699, 0
    %v702 = vshrl.u32 %v701, 5
    %v703 = vand.u32 %v701, 31
    %v704 = vsub.s32 32, %v703
    %v705 = vshrl.u32 683565275, %v704
    %v706 = vshll.u32 683565275, %v703
    %v707 = vshrl.u32 2475754826, %v704
    %v708 = vor.u32 %v706, %v707
    %v709 = vshll.u32 2475754826, %v703
    %v710 = vshrl.u32 2131351028, %v704
    %v711 = vor.u32 %v709, %v710
    %v712 = vshll.u32 2131351028, %v703
    %v713 = vshrl.u32 2102212464, %v704
    %v714 = vor.u32 %v712, %v713
    %v715 = vshll.u32 2102212464, %v703
    %v716 = vshrl.u32 920167782, %v704
    %v717 = vor.u32 %v715, %v716
    %v718 = vshll.u32 920167782, %v703
    %v719 = vshrl.u32 1326507024, %v704
    %v720 = vor.u32 %v718, %v719
    %vm721 = vcmp.lt.s32.totalorder %v702, 1
    %vm722 = vcmp.lt.s32.totalorder %v702, 2
    %vm723 = vcmp.lt.s32.totalorder %v702, 3
    %vm724 = vcmp.lt.s32.totalorder %v702, 4
    %v725 = vsel %vm721, %v705, %v708
    %v726 = vsel %vm724, %v714, 2102212464
    %v727 = vsel %vm723, %v711, %v726
    %v728 = vsel %vm722, %v725, %v727
    %v729 = vsel %vm721, %v708, %v711
    %v730 = vsel %vm724, %v717, 920167782
    %v731 = vsel %vm723, %v714, %v730
    %v732 = vsel %vm722, %v729, %v731
    %v733 = vsel %vm721, %v711, %v714
    %v734 = vsel %vm724, %v720, 1326507024
    %v735 = vsel %vm723, %v717, %v734
    %v736 = vsel %vm722, %v733, %v735
    %v737 = vshll.u32 %v697, 8
    %v738 = vmul.u32.u64.compose %v737, %v736
    %v739 = vextract.low.u32 %v738
    %v740 = vextract.high.u32 %v738
    %v741 = vmul.u32.u64.compose %v737, %v732
    %v742 = vextract.low.u32 %v741
    %v743 = vextract.high.u32 %v741
    %v744 = vmul.u32 %v737, %v728
    %v745 = vadd.s32 %v740, %v742
    %vm746 = vc.u32 %v740, %v742
    %v747 = vadd.s32 %v743, 1
    %v748 = vsel %vm746, %v747, %v743
    %v749 = vadd.s32 %v744, %v748
    %v750 = vadd.s32 %v749, 536870912
    %v751 = vshrl.u32 %v750, 30
    %v752 = vshll.u32 %v751, 30
    %v753 = vsub.s32 %v749, %v752
    %vm754 = vcmp.lt.s32.totalorder %v753, 0
    %v755 = vsub.s32 0, %v753
    %v756 = vsel %vm754, %v755, %v753
    %v757 = vclz %v756
    %v758 = vsub.s32 %v757, 2
    %vm759 = vcmp.gt.s32.totalorder 0, %v758
    %v760 = vsel %vm759, 0, %v758
    %v761 = vsub.s32 32, %v760
    %v762 = vshll.u32 %v753, %v760
    %v763 = vshrl.u32 %v745, %v761
    %v764 = vor.u32 %v762, %v763
    %v765 = vsub.s32 4294967266, %v760
    %v766 = vadd.s32 %v765, 127
    %v767 = vshll.u32 %v766, 23
    %v768 = vor.u32 4788187, %v767
    %v769 = vand.u32 2147483647, %v768
    %v771 = vcvt.s32.f32 %v764
    %v772 = vmul.f32 %v771, %v769
    %v773 = vxor.u32 %v772, 2147483648
    %v774 = vsel %vm691, %v773, %v772
    %v775 = vsub.s32 4, %v751
    %v776 = vsel %vm691, %v775, %v751
    %v777 = vsel %vm690, %v578, %v774
    %v778 = vsel %vm690, 0, %v776
    %v779 = vcosq.f32.pop %v777
    %v780 = vsinq.f32.pop %v777
    %vm781 = vweird.f32 %v578
    %v782 = vand.u32 %v778, 3
    %vm783 = vcmp.lt.s32.totalorder %v782, 2
    %vm784 = vcmp.eq.s32.totalorder %v782, 0
    %v785 = vxor.u32 %v780, 2147483648
    %v786 = vsel %vm784, %v779, %v785
    %vm787 = vcmp.eq.s32.totalorder %v782, 2
    %v788 = vxor.u32 %v779, 2147483648
    %v789 = vsel %vm787, %v788, %v780
    %v790 = vsel %vm783, %v786, %v789
    %v791 = vsel %vm781, nan, %v790
    %v792 = vmul.f32 %v578, 1.442695
    %v793 = vpow.pop %v792
    %v794 = vrcp.pop %v793
    %v795 = vmul.f32 %v793, %v794
    %v796 = vsub.f32 2.0, %v795
    %v797 = vmul.f32 %v794, %v796
    %v798 = vadd.f32 %v793, %v797
    %v799 = vmul.f32 %v798, 0.5
    %v800 = vsub.f32 %v793, %v797
    %v801 = vmul.f32 %v800, 0.5
    %v802 = vmul.f32 %v688, %v584
    %v803 = vmul.f32 %v801, %v584
    %vm804 = vcmp.ge.f32.partialorder %v570, 0.0
    %v805 = vmul.f32 %v570, 0.16666667
    %v806 = vsub.f32 1.0, %v805
    %v807 = vsel %vm804, %v802, %v803
    %v808 = vsel %vm579, %v806, %v807
    %v809 = vadd.f32 %v805, 1.0
    %v810 = vsel %vm804, %v803, %v802
    %v811 = vsel %vm579, %v809, %v810
    %v812 = vsel %vm804, %v791, %v799
    %v813 = vsel %vm804, %v799, %v791
    %v814 = vmul.f32 %v808, 0.122
    %v815 = vmul.f32 %v811, 0.122
    %v816 = vsub.f32 0.0, %v68
    %v817 = vmul.f32 %v816, %v814
    %v818 = vmul.f32 %v68, %v815
    %v819 = vmul.f32 %v314, 0.175
    %v820 = vadd.f32 %v819, %v316
    %v821 = vmul.f32 %v319, 0.175
    %v822 = vadd.f32 %v821, %v314
    %v823 = vmul.f32 %v319, 0.428
    %v824 = vadd.f32 %v314, %v823
    %v825 = vmul.f32 %v822, 0.428
    %v826 = vadd.f32 %v820, %v825
    %v827 = vmul.f32 %v563, %v824
    %v828 = vmul.f32 %v565, %v319
    %v829 = vadd.f32 %v827, %v828
    %v830 = vmul.f32 %v563, %v826
    %v831 = vmul.f32 %v565, %v822
    %v832 = vadd.f32 %v830, %v831
    %v833 = vmul.f32 %v568, %v824
    %v834 = vmul.f32 %v563, %v319
    %v835 = vadd.f32 %v833, %v834
    %v836 = vmul.f32 %v568, %v826
    %v837 = vmul.f32 %v563, %v822
    %v838 = vadd.f32 %v836, %v837
    %v839 = vmul.f32 %v835, 0.204
    %v840 = vadd.f32 %v829, %v839
    %v841 = vmul.f32 %v838, 0.204
    %v842 = vadd.f32 %v832, %v841
    %v843 = vmul.f32 %v835, 0.02
    %v844 = vadd.f32 %v840, %v843
    %v845 = vmul.f32 %v838, 0.02
    %v846 = vadd.f32 %v842, %v845
    %v847 = vadd.f32 %v844, %v839
    %v848 = vadd.f32 %v846, %v841
    %v849 = vmul.f32 %v812, %v847
    %v850 = vmul.f32 %v814, %v835
    %v851 = vadd.f32 %v849, %v850
    %v852 = vmul.f32 %v812, %v848
    %v853 = vmul.f32 %v814, %v838
    %v854 = vadd.f32 %v852, %v853
    %v855 = vmul.f32 %v817, %v847
    %v856 = vmul.f32 %v812, %v835
    %v857 = vadd.f32 %v855, %v856
    %v858 = vmul.f32 %v817, %v848
    %v859 = vmul.f32 %v812, %v838
    %v860 = vadd.f32 %v858, %v859
    %v861 = vmul.f32 %v857, 0.179
    %v862 = vadd.f32 %v851, %v861
    %v863 = vmul.f32 %v860, 0.179
    %v864 = vadd.f32 %v854, %v863
    %v865 = vmul.f32 %v857, 0.02
    %v866 = vadd.f32 %v862, %v865
    %v867 = vmul.f32 %v860, 0.02
    %v868 = vadd.f32 %v864, %v867
    %v869 = vmul.f32 %v857, 0.45
    %v870 = vadd.f32 %v866, %v869
    %v871 = vmul.f32 %v860, 0.45
    %v872 = vadd.f32 %v868, %v871
    %v873 = vmul.f32 %v71, 0.45
    %v874 = vmul.f32 %v315, 0.175
    %v875 = vadd.f32 %v874, %v317
    %v876 = vmul.f32 %v320, 0.175
    %v877 = vadd.f32 %v876, %v315
    %v878 = vmul.f32 %v320, 0.428
    %v879 = vadd.f32 %v315, %v878
    %v880 = vmul.f32 %v877, 0.428
    %v881 = vadd.f32 %v875, %v880
    %v882 = vmul.f32 %v564, %v879
    %v883 = vmul.f32 %v566, %v320
    %v884 = vadd.f32 %v882, %v883
    %v885 = vmul.f32 %v564, %v881
    %v886 = vmul.f32 %v566, %v877
    %v887 = vadd.f32 %v885, %v886
    %v888 = vmul.f32 %v569, %v879
    %v889 = vmul.f32 %v564, %v320
    %v890 = vadd.f32 %v888, %v889
    %v891 = vmul.f32 %v569, %v881
    %v892 = vmul.f32 %v564, %v877
    %v893 = vadd.f32 %v891, %v892
    %v894 = vmul.f32 %v890, 0.204
    %v895 = vadd.f32 %v884, %v894
    %v896 = vmul.f32 %v893, 0.204
    %v897 = vadd.f32 %v887, %v896
    %v898 = vmul.f32 %v890, 0.02
    %v899 = vadd.f32 %v895, %v898
    %v900 = vmul.f32 %v893, 0.02
    %v901 = vadd.f32 %v897, %v900
    %v902 = vadd.f32 %v899, %v894
    %v903 = vadd.f32 %v901, %v896
    %v904 = vmul.f32 %v65, 0.204
    %v905 = vmul.f32 %v813, %v902
    %v906 = vmul.f32 %v815, %v890
    %v907 = vadd.f32 %v905, %v906
    %v908 = vmul.f32 %v813, %v903
    %v909 = vmul.f32 %v815, %v893
    %v910 = vadd.f32 %v908, %v909
    %v911 = vmul.f32 %v818, %v902
    %v912 = vmul.f32 %v813, %v890
    %v913 = vadd.f32 %v911, %v912
    %v914 = vmul.f32 %v818, %v903
    %v915 = vmul.f32 %v813, %v893
    %v916 = vadd.f32 %v914, %v915
    %v917 = vmul.f32 %v813, %v904
    %v918 = vmul.f32 %v815, %v65
    %v919 = vadd.f32 %v917, %v918
    %v920 = vmul.f32 %v818, %v904
    %v921 = vmul.f32 %v813, %v65
    %v922 = vadd.f32 %v920, %v921
    %v923 = vmul.f32 %v913, 0.179
    %v924 = vadd.f32 %v907, %v923
    %v925 = vmul.f32 %v916, 0.179
    %v926 = vadd.f32 %v910, %v925
    %v927 = vmul.f32 %v922, 0.179
    %v928 = vadd.f32 %v919, %v927
    %v929 = vmul.f32 %v913, 0.02
    %v930 = vadd.f32 %v924, %v929
    %v931 = vmul.f32 %v916, 0.02
    %v932 = vadd.f32 %v926, %v931
    %v933 = vmul.f32 %v922, 0.02
    %v934 = vadd.f32 %v928, %v933
    %v935 = vmul.f32 %v913, 0.45
    %v936 = vadd.f32 %v930, %v935
    %v937 = vmul.f32 %v916, 0.45
    %v938 = vadd.f32 %v932, %v937
    %v939 = vmul.f32 %v922, 0.45
    %v940 = vadd.f32 %v934, %v939
    %v941 = vmul.f32 %v870, %v47
    %v942 = vmul.f32 %v872, %v43
    %v943 = vadd.f32 %v941, %v942
    %v944 = vadd.f32 %v943, %v873
    %v945 = vmul.f32 %v936, %v50
    %v946 = vmul.f32 %v938, %v44
    %v947 = vadd.f32 %v945, %v946
    %v948 = vadd.f32 %v947, %v940
    %v949 = vmul.f32 %v870, %v870
    %v950 = vmul.f32 %v53, %v53
    %v951 = vmul.f32 %v949, %v950
    %v952 = vmul.f32 %v872, %v872
    %v953 = vmul.f32 %v952, %v45
    %v954 = vadd.f32 %v951, %v953
    %v955 = vrsqrt.pop %v954
    %v956 = vmul.f32 %v954, %v955
    %vm957 = vcmp.eq.f32.partialorder %v954, inf
    %v958 = vsel %vm957, %v954, %v956
    %vm959 = vcmp.eq.f32.partialorder %v954, 0.0
    %v960 = vand.u32 %v954, 2147483648
    %v961 = vsel %vm959, %v960, %v958
    %v962 = vmul.f32 %v936, %v936
    %v963 = vmul.f32 %v56, %v56
    %v964 = vmul.f32 %v962, %v963
    %v965 = vmul.f32 %v938, %v938
    %v966 = vmul.f32 %v965, %v46
    %v967 = vadd.f32 %v964, %v966
    %v968 = vrsqrt.pop %v967
    %v969 = vmul.f32 %v967, %v968
    %vm970 = vcmp.eq.f32.partialorder %v967, inf
    %v971 = vsel %vm970, %v967, %v969
    %vm972 = vcmp.eq.f32.partialorder %v967, 0.0
    %v973 = vand.u32 %v967, 2147483648
    %v974 = vsel %vm972, %v973, %v971
    %975 = vst [vmem:[#allocation7] sm:$0xff] %v944
    %s976 = scalar_lea.vmem [#allocation7], %s48
    %977 = vst [vmem:[%s976] sm:$0xff] %v948
    %s978 = scalar_lea.vmem [#allocation7], %s51
    %979 = vst [vmem:[%s978] sm:$0xff] %v961
    %s980 = scalar_lea.vmem [#allocation7], %s54
    %981 = vst [vmem:[%s980] sm:$0xff] %v974
    // Predicated region
    $region18: #{tpu_custom_call.1} parent=1 // pred_check
      _
    $region19: #{tpu_custom_call.1} parent=1 // pred_check_branch
      %983 = sbr.rel (0) target = $region21
    $region20: #{tpu_custom_call.1} parent=1 // pred_region
      %s985 = ssub.s32 512, 512
      %986 = vsyncadd [#allocation4], %s985
      %s987 = sshll.u32 [#allocation7], 4
      %s988 = int_to_ptr.vmem [resolvable:$true] %s987
      %993 = dma.vmem_to_hbm [thread:$0]  %s988, 512, %s2, [#allocation4], 128, 128, 8
    $region21: #{tpu_custom_call.1} parent=1 // pred_fallthru
      _
    // Predicated region
    $region22: #{tpu_custom_call.1} parent=1 // pred_check
      _
    $region23: #{tpu_custom_call.1} parent=1 // pred_check_branch
      %995 = sbr.rel (0) target = $region25
    $region24: #{tpu_custom_call.1} parent=1 // pred_region
      %996 = dma.done [#allocation4], 512
    $region25: #{tpu_custom_call.1} parent=1 // pred_fallthru
      _
    %997 = vsyncpa [#allocation3], 1
    %998 = vsyncpa [#allocation4], 1
    %999 = vsyncpa [#allocation5], 1

</llo_original>
